<compile_context>
chip_gen: v5e
topology: v5e:2x2
jax: 0.10.0
libtpu: 0.0.40
codegen_flags: <defaults>
</compile_context>

<pallas_src>
import functools

import jax
import jax.numpy as jnp
from jax import lax
from jax.experimental import pallas as pl
from jax.experimental.pallas import tpu as pltpu


def _round_up(x, m):
    return (x + m - 1) // m * m


# ----------------------------------------------------------------------------
# Kernel: one MLBlock per grid step b in {0,1,2}; residual u1+u3 at b == 2.
# ----------------------------------------------------------------------------
def _gcn_block_kernel(T, B, S, H, N,
                      state_ref, mult_ref,
                      adj_t_ref, watt_t_ref, wih_t_ref, whh_t_ref, wout_t_ref,
                      bias_ref,
                      out_ref, u1_ref, cur_ref):
    b = pl.program_id(0)
    TB = T * B
    Np = state_ref.shape[-1]          # lane-padded node count (multiple of 128)
    H3 = 3 * H

    # Block 0 consumes the (padded) input state; later blocks consume the
    # previous block's output carried in VMEM scratch.
    @pl.when(b == 0)
    def _():
        cur_ref[...] = state_ref[...]

    x = cur_ref[...]                                      # (TB, Np) f32

    # Packed per-block biases: row0=linear_att.b, row1=b_ih, row2=b_hh,
    # row3=linear_out.b (each zero-padded to the packed lane width W).
    bias = bias_ref[0]                                    # (4, W) f32
    batt = bias[0:1, :Np]
    bih = bias[1:2, :H3]
    bhh = bias[2:3, :H3]
    bout = bias[3:4, :Np]

    lane = lax.broadcasted_iota(jnp.int32, (TB, Np), 1)
    node_mask = lane < N                                  # real node columns
    skill_mask = lane < S                                 # skill columns

    # exercise_state *= (1 + influence); skill / padded columns multiply by 1.
    xs = (x * mult_ref[...]).astype(jnp.bfloat16)

    # einsum('ij,jkl->lki', adj, x.permute(2,1,0)) == x @ adj.T   (MXU)
    h = jnp.dot(xs, adj_t_ref[0], preferred_element_type=jnp.float32)

    # h * softmax(h, -1) over the real N columns only (padded lanes are kept
    # out of the max and the denominator).  exp + approx reciprocal -> EUP.
    hm = jnp.where(node_mask, h, -1e30)
    m = jnp.max(hm, axis=-1, keepdims=True)
    e = jnp.where(node_mask, jnp.exp(h - m), 0.0)
    denom = jnp.sum(e, axis=-1, keepdims=True)            # >= 1, safe for approx
    att = h * e * pl.reciprocal(denom, approx=True)

    # relu(linear_att(att)); zero-padded weight rows/cols keep padded lanes 0.
    h = jnp.dot(att.astype(jnp.bfloat16), watt_t_ref[0],
                preferred_element_type=jnp.float32) + batt
    h = jnp.maximum(h, 0.0)                               # (TB, Np) f32

    # GRU input projection for all timesteps at once, kept in vregs (no
    # scratch round-trip).  wih_t rows >= S are zero == h[:, :S] @ W_ih.T.
    gi = jnp.dot(h.astype(jnp.bfloat16), wih_t_ref[0],
                 preferred_element_type=jnp.float32) + bih  # (TB, 3H)

    whh_t = whh_t_ref[0]                                  # (H, 3H) bf16
    bhh_b = jnp.broadcast_to(bhh, (B, H3))                # hoisted broadcast

    # TODO(synk): keep whh_t weight-stationary in the MXU across the unrolled
    # steps (pltpu.matmul_push_rhs / matmul_acc_lhs / matmul_pop); the explicit
    # MXU path does not lower cleanly at these tiny (8,16)x(16,48) shapes, so
    # the per-step jnp.dot stays.
    h_prev = jnp.zeros((B, H), jnp.float32)
    hs = []
    for t in range(T):      # T static -> fully unrolled, static value slices
        gi_t = gi[t * B:(t + 1) * B, :]                   # (B, 3H)
        gh = jnp.dot(h_prev.astype(jnp.bfloat16), whh_t,
                     preferred_element_type=jnp.float32) + bhh_b
        # PyTorch GRU gate order r, z, n;  b_hn stays inside r * (...).
        rz = jax.nn.sigmoid(gi_t[:, :2 * H] + gh[:, :2 * H])
        z = rz[:, H:2 * H]
        n = jnp.tanh(gi_t[:, 2 * H:] + rz[:, :H] * gh[:, 2 * H:])
        h_prev = n + z * (h_prev - n)                     # == (1-z)*n + z*h
        hs.append(h_prev)
    gru_h = jnp.concatenate(hs, axis=0)                   # (TB, H) in registers

    # linear_out on all GRU hidden states; wout_t cols >= S are zero.
    skill_out = jnp.dot(gru_h.astype(jnp.bfloat16), wout_t_ref[0],
                        preferred_element_type=jnp.float32) + bout

    # out[:, :S] = skill_out ; out[:, S:] = h[:, S:]  (mask merge, no concat)
    u = jnp.where(skill_mask, skill_out, h)

    @pl.when(b == 0)
    def _():
        u1_ref[...] = u                                   # save for residual

    cur_ref[...] = u                                      # carry to next block

    @pl.when(b == pl.num_programs(0) - 1)
    def _():
        out_ref[...] = u1_ref[...] + u                    # residual u1 + u3


# ---------------------------------------------------------------------------
# Wrapper: one pallas_call, grid over the 3 MLBlocks, lane-padded node axis.
# ---------------------------------------------------------------------------
@functools.partial(jax.jit, static_argnames=("num_skill", "hidden"))
def gcn_layer(all_state_init, influence, params, *, num_skill, hidden):
    T, B, N = all_state_init.shape
    S, H = num_skill, hidden
    Np = params["adj_t"].shape[-1]                        # lane-padded N
    W = params["bias"].shape[-1]                          # packed bias width
    TB = T * B

    # Zero-pad state to Np lanes; build (1 + influence) multiplier padded with
    # 1.0 so the kernel does one full-width elementwise multiply.
    state_pad = jnp.zeros((T, B, Np), jnp.float32).at[:, :, :N].set(all_state_init)
    mult_pad = jnp.ones((T, B, Np), jnp.float32).at[:, :, S:N].set(1.0 + influence)
    state2 = state_pad.reshape(TB, Np)
    mult2 = mult_pad.reshape(TB, Np)

    kernel = functools.partial(_gcn_block_kernel, T, B, S, H, N)

    def full2d(shp):
        return pl.BlockSpec(shp, lambda b: (0, 0))

    def perblock(shp):
        return pl.BlockSpec((1,) + shp, lambda b: (b, 0, 0))

    out2 = pl.pallas_call(
        kernel,
        out_shape=jax.ShapeDtypeStruct((TB, Np), jnp.float32),
        grid=(3,),
        in_specs=[
            full2d((TB, Np)),              # state (resident across blocks)
            full2d((TB, Np)),              # influence multiplier
            perblock((Np, Np)),            # adj_t
            perblock((Np, Np)),            # watt_t
            perblock((Np, 3 * H)),         # wih_t  (rows >= S zero)
            perblock((H, 3 * H)),          # whh_t
            perblock((H, Np)),             # wout_t (cols >= S zero)
            perblock((4, W)),              # packed biases
        ],
        out_specs=full2d((TB, Np)),        # lane-dense output, written at b==2
        scratch_shapes=[
            pltpu.VMEM((TB, Np), jnp.float32),   # u1 (for residual)
            pltpu.VMEM((TB, Np), jnp.float32),   # running block state
        ],
        compiler_params=pltpu.CompilerParams(
            dimension_semantics=("arbitrary",),  # blocks are sequential
            vmem_limit_bytes=16 * 1024 * 1024,   # << actual need; ample headroom
        ),
    )(state2, mult2,
      params["adj_t"], params["watt_t"], params["wih_t"],
      params["whh_t"], params["wout_t"], params["bias"])

    return out2[:, :N].reshape(T, B, Np)[..., :N] if False else out2[:, :N].reshape(T, B, N)


# ---------------------------------------------------------------------------
# Parameter construction (deterministic, synthetic).  Matmul weights in bf16,
# zero-padded to the lane-padded node axis so no lane slicing is needed.
# ---------------------------------------------------------------------------
def init_block_params(key, adj_hat, num_skill, num_exercise, hidden, n_pad):
    N = num_skill + num_exercise
    S, H = num_skill, hidden
    Np = n_pad
    W = max(Np, 3 * H)
    ks = jax.random.split(key, 8)
    s = 0.1
    watt = jax.random.normal(ks[0], (N, N), jnp.float32) * s        # linear_att.weight
    batt = jax.random.normal(ks[1], (N,), jnp.float32) * s          # linear_att.bias
    wih = jax.random.normal(ks[2], (3 * H, S), jnp.float32) * s     # gru.weight_ih_l0
    whh = jax.random.normal(ks[3], (3 * H, H), jnp.float32) * s     # gru.weight_hh_l0
    bih = jax.random.normal(ks[4], (3 * H,), jnp.float32) * s
    bhh = jax.random.normal(ks[5], (3 * H,), jnp.float32) * s
    wout = jax.random.normal(ks[6], (S, H), jnp.float32) * s        # linear_out.weight
    bout = jax.random.normal(ks[7], (S,), jnp.float32) * s

    adj_t = jnp.zeros((Np, Np), jnp.float32).at[:N, :N].set(jnp.asarray(adj_hat, jnp.float32).T)
    watt_t = jnp.zeros((Np, Np), jnp.float32).at[:N, :N].set(watt.T)
    wih_t = jnp.zeros((Np, 3 * H), jnp.float32).at[:S, :].set(wih.T)    # rows >= S zero
    wout_t = jnp.zeros((H, Np), jnp.float32).at[:, :S].set(wout.T)      # cols >= S zero
    bias = jnp.zeros((4, W), jnp.float32)
    bias = bias.at[0, :N].set(batt)
    bias = bias.at[1, :3 * H].set(bih)
    bias = bias.at[2, :3 * H].set(bhh)
    bias = bias.at[3, :S].set(bout)

    return dict(
        adj_t=adj_t.astype(jnp.bfloat16),
        watt_t=watt_t.astype(jnp.bfloat16),
        wih_t=wih_t.astype(jnp.bfloat16),
        whh_t=whh.T.astype(jnp.bfloat16),
        wout_t=wout_t.astype(jnp.bfloat16),
        bias=bias,
    )


def stack_block_params(blocks):
    """Stack the three blocks' parameters along a leading axis of size 3."""
    return {k: jnp.stack([blk[k] for blk in blocks], axis=0) for k in blocks[0]}


if __name__ == "__main__":
    num_skill, num_exercise, hidden = 8, 8, 16
    num_nodes = num_skill + num_exercise
    T, B = 8, 8                                  # seq_len, batch
    n_pad = _round_up(num_nodes, 128)            # lane-dense node axis

    key = jax.random.PRNGKey(0)
    k_adj, k_state, k_infl, kb1, kb2, kb3 = jax.random.split(key, 6)

    # Deterministic symmetric-normalized "adjacency" matrix (A_hat style).
    a = jnp.abs(jax.random.normal(k_adj, (num_nodes, num_nodes), jnp.float32))
    a = 0.5 * (a + a.T) + jnp.eye(num_nodes, dtype=jnp.float32)
    deg = jnp.sum(a, axis=-1, keepdims=True)
    adj_hat = a / jnp.sqrt(deg) / jnp.sqrt(deg.T)

    all_state_init = jax.random.normal(k_state, (T, B, num_nodes), jnp.float32)
    influence = jax.random.normal(k_infl, (T, B, num_exercise), jnp.float32) * 0.1

    blocks = [init_block_params(k, adj_hat, num_skill, num_exercise, hidden, n_pad)
              for k in (kb1, kb2, kb3)]
    params = stack_block_params(blocks)

    out = gcn_layer(all_state_init, influence, params,
                    num_skill=num_skill, hidden=hidden)
    out = jax.block_until_ready(out)
    assert out.shape == (T, B, num_nodes) and out.dtype == jnp.float32
    # TODO(synk): at production batch sizes add a "parallel" grid axis over B
    # (v7x 2-TC megacore); at B=8 it is pure overhead, so it is omitted here.
    print("KERNEL_OK")
</pallas_src>

<mosaic_0001>
module attributes {stable_mosaic.version = 11 : i64} {
  func.func @_gcn_block_kernel(%arg0: i32, %arg1: memref<64x128xf32, #tpu.memory_space<vmem>>, %arg2: memref<64x128xf32, #tpu.memory_space<vmem>>, %arg3: memref<1x128x128xbf16, #tpu.memory_space<vmem>>, %arg4: memref<1x128x128xbf16, #tpu.memory_space<vmem>>, %arg5: memref<1x128x48xbf16, #tpu.memory_space<vmem>>, %arg6: memref<1x16x48xbf16, #tpu.memory_space<vmem>>, %arg7: memref<1x16x128xbf16, #tpu.memory_space<vmem>>, %arg8: memref<1x4x128xf32, #tpu.memory_space<vmem>>, %arg9: memref<64x128xf32, #tpu.memory_space<vmem>>, %arg10: memref<64x128xf32, #tpu.memory_space<vmem>>, %arg11: memref<64x128xf32, #tpu.memory_space<vmem>>) attributes {dimension_semantics = [#tpu.dimension_semantics<arbitrary>], iteration_bounds = array<i64: 3>, scalar_prefetch = 0 : i64, scratch_operands = 2 : i64, tpu.core_type = #tpu.core_type<tc>, window_params = [{pipeline_mode = #tpu.pipeline_mode<synchronous>, transform_indices = @transform_0, window_bounds = array<i64: 64, 128>}, {pipeline_mode = #tpu.pipeline_mode<synchronous>, transform_indices = @transform_1, window_bounds = array<i64: 64, 128>}, {transform_indices = @transform_2, window_bounds = array<i64: 1, 128, 128>}, {transform_indices = @transform_3, window_bounds = array<i64: 1, 128, 128>}, {transform_indices = @transform_4, window_bounds = array<i64: 1, 128, 48>}, {transform_indices = @transform_5, window_bounds = array<i64: 1, 16, 48>}, {transform_indices = @transform_6, window_bounds = array<i64: 1, 16, 128>}, {transform_indices = @transform_7, window_bounds = array<i64: 1, 4, 128>}, {pipeline_mode = #tpu.pipeline_mode<synchronous>, transform_indices = @transform_8, window_bounds = array<i64: 64, 128>}]} {
    %c0_i32 = arith.constant 0 : i32
    %0 = arith.cmpi eq, %arg0, %c0_i32 : i32
    %1 = arith.extui %0 : i1 to i32
    %c0_i32_0 = arith.constant 0 : i32
    %2 = arith.cmpi ne, %1, %c0_i32_0 : i32
    scf.if %2 {
      %c0_52 = arith.constant 0 : index
      %c0_53 = arith.constant 0 : index
      %246 = vector.load %arg1[%c0_52, %c0_53] : memref<64x128xf32, #tpu.memory_space<vmem>>, vector<64x128xf32>
      %c0_54 = arith.constant 0 : index
      %c0_55 = arith.constant 0 : index
      %247 = vector.load %arg11[%c0_54, %c0_55] : memref<64x128xf32, #tpu.memory_space<vmem>>, vector<64x128xf32>
      tpu.vector_store %arg11[%c0_54, %c0_55], %246 {strides = array<i32>} : memref<64x128xf32, #tpu.memory_space<vmem>>, vector<64x128xf32>,
    } else {
    }
    %c0 = arith.constant 0 : index
    %c0_1 = arith.constant 0 : index
    %3 = vector.load %arg11[%c0, %c0_1] : memref<64x128xf32, #tpu.memory_space<vmem>>, vector<64x128xf32>
    %c0_2 = arith.constant 0 : index
    %c0_3 = arith.constant 0 : index
    %c0_4 = arith.constant 0 : index
    %4 = vector.load %arg8[%c0_2, %c0_3, %c0_4] : memref<1x4x128xf32, #tpu.memory_space<vmem>>, vector<1x4x128xf32>
    %5 = vector.shape_cast %4 : vector<1x4x128xf32> to vector<4x128xf32>
    %6 = vector.extract_strided_slice %5 {offsets = [0, 0], sizes = [1, 128], strides = [1, 1]} : vector<4x128xf32> to vector<1x128xf32>
    %7 = vector.extract_strided_slice %5 {offsets = [1, 0], sizes = [1, 48], strides = [1, 1]} : vector<4x128xf32> to vector<1x48xf32>
    %8 = vector.extract_strided_slice %5 {offsets = [2, 0], sizes = [1, 48], strides = [1, 1]} : vector<4x128xf32> to vector<1x48xf32>
    %9 = vector.extract_strided_slice %5 {offsets = [3, 0], sizes = [1, 128], strides = [1, 1]} : vector<4x128xf32> to vector<1x128xf32>
    %10 = tpu.iota {dimensions = array<i32: 1>} : vector<64x128xi32>
    %c16_i32 = arith.constant 16 : i32
    %11 = vector.broadcast %c16_i32 : i32 to vector<64x128xi32>
    %12 = arith.cmpi slt, %10, %11 : vector<64x128xi32>
    %c8_i32 = arith.constant 8 : i32
    %13 = vector.broadcast %c8_i32 : i32 to vector<64x128xi32>
    %14 = arith.cmpi slt, %10, %13 : vector<64x128xi32>
    %c0_5 = arith.constant 0 : index
    %c0_6 = arith.constant 0 : index
    %15 = vector.load %arg2[%c0_5, %c0_6] : memref<64x128xf32, #tpu.memory_space<vmem>>, vector<64x128xf32>
    %16 = arith.mulf %3, %15 : vector<64x128xf32>
    %17 = arith.truncf %16 : vector<64x128xf32> to vector<64x128xbf16>
    %c0_7 = arith.constant 0 : index
    %c0_8 = arith.constant 0 : index
    %c0_9 = arith.constant 0 : index
    %18 = vector.load %arg3[%c0_7, %c0_8, %c0_9] : memref<1x128x128xbf16, #tpu.memory_space<vmem>>, vector<1x128x128xbf16>
    %19 = vector.shape_cast %18 : vector<1x128x128xbf16> to vector<128x128xbf16>
    %cst = arith.constant dense<0.000000e+00> : vector<64x128xf32>
    %20 = tpu.matmul %17, %19, %cst {dimension_numbers = #tpu.dot_dimension_numbers<[1], [0], [0], [1], [0, 0, 1, 1], [], []>} : vector<64x128xbf16>, vector<128x128xbf16>, vector<64x128xf32> -> vector<64x128xf32>
    %cst_10 = arith.constant -1.000000e+30 : f32
    %21 = vector.broadcast %cst_10 : f32 to vector<64x128xf32>
    %22 = arith.select %12, %20, %21 : vector<64x128xi1>, vector<64x128xf32>
    %cst_11 = arith.constant dense<0xFF800000> : vector<64xf32>
    %23 = vector.multi_reduction <maximumf>, %22, %cst_11 [1] : vector<64x128xf32> to vector<64xf32>
    %24 = vector.shape_cast %23 : vector<64xf32> to vector<64x1xf32>
    %25 = vector.broadcast %24 : vector<64x1xf32> to vector<64x128xf32>
    %26 = arith.subf %20, %25 : vector<64x128xf32>
    %27 = math.exp %26 : vector<64x128xf32>
    %cst_12 = arith.constant 0.000000e+00 : f32
    %28 = vector.broadcast %cst_12 : f32 to vector<64x128xf32>
    %29 = arith.select %12, %27, %28 : vector<64x128xi1>, vector<64x128xf32>
    %cst_13 = arith.constant dense<0.000000e+00> : vector<64xf32>
    %30 = vector.multi_reduction <add>, %29, %cst_13 [1] : vector<64x128xf32> to vector<64xf32>
    %31 = vector.shape_cast %30 : vector<64xf32> to vector<64x1xf32>
    %32 = arith.mulf %20, %29 : vector<64x128xf32>
    %33 = tpu.reciprocal %31 {approx = true} : vector<64x1xf32> -> vector<64x1xf32>
    %34 = vector.broadcast %33 : vector<64x1xf32> to vector<64x128xf32>
    %35 = arith.mulf %32, %34 : vector<64x128xf32>
    %36 = arith.truncf %35 : vector<64x128xf32> to vector<64x128xbf16>
    %c0_14 = arith.constant 0 : index
    %c0_15 = arith.constant 0 : index
    %c0_16 = arith.constant 0 : index
    %37 = vector.load %arg4[%c0_14, %c0_15, %c0_16] : memref<1x128x128xbf16, #tpu.memory_space<vmem>>, vector<1x128x128xbf16>
    %38 = vector.shape_cast %37 : vector<1x128x128xbf16> to vector<128x128xbf16>
    %cst_17 = arith.constant dense<0.000000e+00> : vector<64x128xf32>
    %39 = tpu.matmul %36, %38, %cst_17 {dimension_numbers = #tpu.dot_dimension_numbers<[1], [0], [0], [1], [0, 0, 1, 1], [], []>} : vector<64x128xbf16>, vector<128x128xbf16>, vector<64x128xf32> -> vector<64x128xf32>
    %40 = vector.broadcast %6 : vector<1x128xf32> to vector<64x128xf32>
    %41 = arith.addf %39, %40 : vector<64x128xf32>
    %cst_18 = arith.constant 0.000000e+00 : f32
    %42 = vector.broadcast %cst_18 : f32 to vector<64x128xf32>
    %43 = arith.maximumf %41, %42 : vector<64x128xf32>
    %44 = arith.truncf %43 : vector<64x128xf32> to vector<64x128xbf16>
    %c0_19 = arith.constant 0 : index
    %c0_20 = arith.constant 0 : index
    %c0_21 = arith.constant 0 : index
    %45 = vector.load %arg5[%c0_19, %c0_20, %c0_21] : memref<1x128x48xbf16, #tpu.memory_space<vmem>>, vector<1x128x48xbf16>
    %46 = vector.shape_cast %45 : vector<1x128x48xbf16> to vector<128x48xbf16>
    %cst_22 = arith.constant dense<0.000000e+00> : vector<64x48xf32>
    %47 = tpu.matmul %44, %46, %cst_22 {dimension_numbers = #tpu.dot_dimension_numbers<[1], [0], [0], [1], [0, 0, 1, 1], [], []>} : vector<64x128xbf16>, vector<128x48xbf16>, vector<64x48xf32> -> vector<64x48xf32>
    %48 = vector.broadcast %7 : vector<1x48xf32> to vector<64x48xf32>
    %49 = arith.addf %47, %48 : vector<64x48xf32>
    %c0_23 = arith.constant 0 : index
    %c0_24 = arith.constant 0 : index
    %c0_25 = arith.constant 0 : index
    %50 = vector.load %arg6[%c0_23, %c0_24, %c0_25] : memref<1x16x48xbf16, #tpu.memory_space<vmem>>, vector<1x16x48xbf16>
    %51 = vector.shape_cast %50 : vector<1x16x48xbf16> to vector<16x48xbf16>
    %52 = vector.shape_cast %8 : vector<1x48xf32> to vector<1x48xf32>
    %53 = vector.broadcast %52 : vector<1x48xf32> to vector<8x48xf32>
    %cst_26 = arith.constant 0.000000e+00 : f32
    %54 = vector.broadcast %cst_26 : f32 to vector<8x16xf32>
    %55 = vector.extract_strided_slice %49 {offsets = [0, 0], sizes = [8, 48], strides = [1, 1]} : vector<64x48xf32> to vector<8x48xf32>
    %56 = arith.truncf %54 : vector<8x16xf32> to vector<8x16xbf16>
    %cst_27 = arith.constant dense<0.000000e+00> : vector<8x48xf32>
    %57 = tpu.matmul %56, %51, %cst_27 {dimension_numbers = #tpu.dot_dimension_numbers<[1], [0], [0], [1], [0, 0, 1, 1], [], []>} : vector<8x16xbf16>, vector<16x48xbf16>, vector<8x48xf32> -> vector<8x48xf32>
    %58 = arith.addf %57, %53 : vector<8x48xf32>
    %59 = vector.extract_strided_slice %55 {offsets = [0, 0], sizes = [8, 32], strides = [1, 1]} : vector<8x48xf32> to vector<8x32xf32>
    %60 = vector.extract_strided_slice %58 {offsets = [0, 0], sizes = [8, 32], strides = [1, 1]} : vector<8x48xf32> to vector<8x32xf32>
    %61 = arith.addf %59, %60 : vector<8x32xf32>
    %62 = arith.negf %61 : vector<8x32xf32>
    %63 = math.exp %62 : vector<8x32xf32>
    %cst_28 = arith.constant 1.000000e+00 : f32
    %64 = vector.broadcast %cst_28 : f32 to vector<8x32xf32>
    %65 = arith.addf %64, %63 : vector<8x32xf32>
    %66 = arith.divf %64, %65 : vector<8x32xf32>
    %67 = vector.extract_strided_slice %66 {offsets = [0, 16], sizes = [8, 16], strides = [1, 1]} : vector<8x32xf32> to vector<8x16xf32>
    %68 = vector.extract_strided_slice %55 {offsets = [0, 32], sizes = [8, 16], strides = [1, 1]} : vector<8x48xf32> to vector<8x16xf32>
    %69 = vector.extract_strided_slice %66 {offsets = [0, 0], sizes = [8, 16], strides = [1, 1]} : vector<8x32xf32> to vector<8x16xf32>
    %70 = vector.extract_strided_slice %58 {offsets = [0, 32], sizes = [8, 16], strides = [1, 1]} : vector<8x48xf32> to vector<8x16xf32>
    %71 = arith.mulf %69, %70 : vector<8x16xf32>
    %72 = arith.addf %68, %71 : vector<8x16xf32>
    %73 = math.tanh %72 : vector<8x16xf32>
    %74 = arith.subf %54, %73 : vector<8x16xf32>
    %75 = arith.mulf %67, %74 : vector<8x16xf32>
    %76 = arith.addf %73, %75 : vector<8x16xf32>
    %77 = vector.extract_strided_slice %49 {offsets = [8, 0], sizes = [8, 48], strides = [1, 1]} : vector<64x48xf32> to vector<8x48xf32>
    %78 = arith.truncf %76 : vector<8x16xf32> to vector<8x16xbf16>
    %cst_29 = arith.constant dense<0.000000e+00> : vector<8x48xf32>
    %79 = tpu.matmul %78, %51, %cst_29 {dimension_numbers = #tpu.dot_dimension_numbers<[1], [0], [0], [1], [0, 0, 1, 1], [], []>} : vector<8x16xbf16>, vector<16x48xbf16>, vector<8x48xf32> -> vector<8x48xf32>
    %80 = arith.addf %79, %53 : vector<8x48xf32>
    %81 = vector.extract_strided_slice %77 {offsets = [0, 0], sizes = [8, 32], strides = [1, 1]} : vector<8x48xf32> to vector<8x32xf32>
    %82 = vector.extract_strided_slice %80 {offsets = [0, 0], sizes = [8, 32], strides = [1, 1]} : vector<8x48xf32> to vector<8x32xf32>
    %83 = arith.addf %81, %82 : vector<8x32xf32>
    %84 = arith.negf %83 : vector<8x32xf32>
    %85 = math.exp %84 : vector<8x32xf32>
    %cst_30 = arith.constant 1.000000e+00 : f32
    %86 = vector.broadcast %cst_30 : f32 to vector<8x32xf32>
    %87 = arith.addf %86, %85 : vector<8x32xf32>
    %88 = arith.divf %86, %87 : vector<8x32xf32>
    %89 = vector.extract_strided_slice %88 {offsets = [0, 16], sizes = [8, 16], strides = [1, 1]} : vector<8x32xf32> to vector<8x16xf32>
    %90 = vector.extract_strided_slice %77 {offsets = [0, 32], sizes = [8, 16], strides = [1, 1]} : vector<8x48xf32> to vector<8x16xf32>
    %91 = vector.extract_strided_slice %88 {offsets = [0, 0], sizes = [8, 16], strides = [1, 1]} : vector<8x32xf32> to vector<8x16xf32>
    %92 = vector.extract_strided_slice %80 {offsets = [0, 32], sizes = [8, 16], strides = [1, 1]} : vector<8x48xf32> to vector<8x16xf32>
    %93 = arith.mulf %91, %92 : vector<8x16xf32>
    %94 = arith.addf %90, %93 : vector<8x16xf32>
    %95 = math.tanh %94 : vector<8x16xf32>
    %96 = arith.subf %76, %95 : vector<8x16xf32>
    %97 = arith.mulf %89, %96 : vector<8x16xf32>
    %98 = arith.addf %95, %97 : vector<8x16xf32>
    %99 = vector.extract_strided_slice %49 {offsets = [16, 0], sizes = [8, 48], strides = [1, 1]} : vector<64x48xf32> to vector<8x48xf32>
    %100 = arith.truncf %98 : vector<8x16xf32> to vector<8x16xbf16>
    %cst_31 = arith.constant dense<0.000000e+00> : vector<8x48xf32>
    %101 = tpu.matmul %100, %51, %cst_31 {dimension_numbers = #tpu.dot_dimension_numbers<[1], [0], [0], [1], [0, 0, 1, 1], [], []>} : vector<8x16xbf16>, vector<16x48xbf16>, vector<8x48xf32> -> vector<8x48xf32>
    %102 = arith.addf %101, %53 : vector<8x48xf32>
    %103 = vector.extract_strided_slice %99 {offsets = [0, 0], sizes = [8, 32], strides = [1, 1]} : vector<8x48xf32> to vector<8x32xf32>
    %104 = vector.extract_strided_slice %102 {offsets = [0, 0], sizes = [8, 32], strides = [1, 1]} : vector<8x48xf32> to vector<8x32xf32>
    %105 = arith.addf %103, %104 : vector<8x32xf32>
    %106 = arith.negf %105 : vector<8x32xf32>
    %107 = math.exp %106 : vector<8x32xf32>
    %cst_32 = arith.constant 1.000000e+00 : f32
    %108 = vector.broadcast %cst_32 : f32 to vector<8x32xf32>
    %109 = arith.addf %108, %107 : vector<8x32xf32>
    %110 = arith.divf %108, %109 : vector<8x32xf32>
    %111 = vector.extract_strided_slice %110 {offsets = [0, 16], sizes = [8, 16], strides = [1, 1]} : vector<8x32xf32> to vector<8x16xf32>
    %112 = vector.extract_strided_slice %99 {offsets = [0, 32], sizes = [8, 16], strides = [1, 1]} : vector<8x48xf32> to vector<8x16xf32>
    %113 = vector.extract_strided_slice %110 {offsets = [0, 0], sizes = [8, 16], strides = [1, 1]} : vector<8x32xf32> to vector<8x16xf32>
    %114 = vector.extract_strided_slice %102 {offsets = [0, 32], sizes = [8, 16], strides = [1, 1]} : vector<8x48xf32> to vector<8x16xf32>
    %115 = arith.mulf %113, %114 : vector<8x16xf32>
    %116 = arith.addf %112, %115 : vector<8x16xf32>
    %117 = math.tanh %116 : vector<8x16xf32>
    %118 = arith.subf %98, %117 : vector<8x16xf32>
    %119 = arith.mulf %111, %118 : vector<8x16xf32>
    %120 = arith.addf %117, %119 : vector<8x16xf32>
    %121 = vector.extract_strided_slice %49 {offsets = [24, 0], sizes = [8, 48], strides = [1, 1]} : vector<64x48xf32> to vector<8x48xf32>
    %122 = arith.truncf %120 : vector<8x16xf32> to vector<8x16xbf16>
    %cst_33 = arith.constant dense<0.000000e+00> : vector<8x48xf32>
    %123 = tpu.matmul %122, %51, %cst_33 {dimension_numbers = #tpu.dot_dimension_numbers<[1], [0], [0], [1], [0, 0, 1, 1], [], []>} : vector<8x16xbf16>, vector<16x48xbf16>, vector<8x48xf32> -> vector<8x48xf32>
    %124 = arith.addf %123, %53 : vector<8x48xf32>
    %125 = vector.extract_strided_slice %121 {offsets = [0, 0], sizes = [8, 32], strides = [1, 1]} : vector<8x48xf32> to vector<8x32xf32>
    %126 = vector.extract_strided_slice %124 {offsets = [0, 0], sizes = [8, 32], strides = [1, 1]} : vector<8x48xf32> to vector<8x32xf32>
    %127 = arith.addf %125, %126 : vector<8x32xf32>
    %128 = arith.negf %127 : vector<8x32xf32>
    %129 = math.exp %128 : vector<8x32xf32>
    %cst_34 = arith.constant 1.000000e+00 : f32
    %130 = vector.broadcast %cst_34 : f32 to vector<8x32xf32>
    %131 = arith.addf %130, %129 : vector<8x32xf32>
    %132 = arith.divf %130, %131 : vector<8x32xf32>
    %133 = vector.extract_strided_slice %132 {offsets = [0, 16], sizes = [8, 16], strides = [1, 1]} : vector<8x32xf32> to vector<8x16xf32>
    %134 = vector.extract_strided_slice %121 {offsets = [0, 32], sizes = [8, 16], strides = [1, 1]} : vector<8x48xf32> to vector<8x16xf32>
    %135 = vector.extract_strided_slice %132 {offsets = [0, 0], sizes = [8, 16], strides = [1, 1]} : vector<8x32xf32> to vector<8x16xf32>
    %136 = vector.extract_strided_slice %124 {offsets = [0, 32], sizes = [8, 16], strides = [1, 1]} : vector<8x48xf32> to vector<8x16xf32>
    %137 = arith.mulf %135, %136 : vector<8x16xf32>
    %138 = arith.addf %134, %137 : vector<8x16xf32>
    %139 = math.tanh %138 : vector<8x16xf32>
    %140 = arith.subf %120, %139 : vector<8x16xf32>
    %141 = arith.mulf %133, %140 : vector<8x16xf32>
    %142 = arith.addf %139, %141 : vector<8x16xf32>
    %143 = vector.extract_strided_slice %49 {offsets = [32, 0], sizes = [8, 48], strides = [1, 1]} : vector<64x48xf32> to vector<8x48xf32>
    %144 = arith.truncf %142 : vector<8x16xf32> to vector<8x16xbf16>
    %cst_35 = arith.constant dense<0.000000e+00> : vector<8x48xf32>
    %145 = tpu.matmul %144, %51, %cst_35 {dimension_numbers = #tpu.dot_dimension_numbers<[1], [0], [0], [1], [0, 0, 1, 1], [], []>} : vector<8x16xbf16>, vector<16x48xbf16>, vector<8x48xf32> -> vector<8x48xf32>
    %146 = arith.addf %145, %53 : vector<8x48xf32>
    %147 = vector.extract_strided_slice %143 {offsets = [0, 0], sizes = [8, 32], strides = [1, 1]} : vector<8x48xf32> to vector<8x32xf32>
    %148 = vector.extract_strided_slice %146 {offsets = [0, 0], sizes = [8, 32], strides = [1, 1]} : vector<8x48xf32> to vector<8x32xf32>
    %149 = arith.addf %147, %148 : vector<8x32xf32>
    %150 = arith.negf %149 : vector<8x32xf32>
    %151 = math.exp %150 : vector<8x32xf32>
    %cst_36 = arith.constant 1.000000e+00 : f32
    %152 = vector.broadcast %cst_36 : f32 to vector<8x32xf32>
    %153 = arith.addf %152, %151 : vector<8x32xf32>
    %154 = arith.divf %152, %153 : vector<8x32xf32>
    %155 = vector.extract_strided_slice %154 {offsets = [0, 16], sizes = [8, 16], strides = [1, 1]} : vector<8x32xf32> to vector<8x16xf32>
    %156 = vector.extract_strided_slice %143 {offsets = [0, 32], sizes = [8, 16], strides = [1, 1]} : vector<8x48xf32> to vector<8x16xf32>
    %157 = vector.extract_strided_slice %154 {offsets = [0, 0], sizes = [8, 16], strides = [1, 1]} : vector<8x32xf32> to vector<8x16xf32>
    %158 = vector.extract_strided_slice %146 {offsets = [0, 32], sizes = [8, 16], strides = [1, 1]} : vector<8x48xf32> to vector<8x16xf32>
    %159 = arith.mulf %157, %158 : vector<8x16xf32>
    %160 = arith.addf %156, %159 : vector<8x16xf32>
    %161 = math.tanh %160 : vector<8x16xf32>
    %162 = arith.subf %142, %161 : vector<8x16xf32>
    %163 = arith.mulf %155, %162 : vector<8x16xf32>
    %164 = arith.addf %161, %163 : vector<8x16xf32>
    %165 = vector.extract_strided_slice %49 {offsets = [40, 0], sizes = [8, 48], strides = [1, 1]} : vector<64x48xf32> to vector<8x48xf32>
    %166 = arith.truncf %164 : vector<8x16xf32> to vector<8x16xbf16>
    %cst_37 = arith.constant dense<0.000000e+00> : vector<8x48xf32>
    %167 = tpu.matmul %166, %51, %cst_37 {dimension_numbers = #tpu.dot_dimension_numbers<[1], [0], [0], [1], [0, 0, 1, 1], [], []>} : vector<8x16xbf16>, vector<16x48xbf16>, vector<8x48xf32> -> vector<8x48xf32>
    %168 = arith.addf %167, %53 : vector<8x48xf32>
    %169 = vector.extract_strided_slice %165 {offsets = [0, 0], sizes = [8, 32], strides = [1, 1]} : vector<8x48xf32> to vector<8x32xf32>
    %170 = vector.extract_strided_slice %168 {offsets = [0, 0], sizes = [8, 32], strides = [1, 1]} : vector<8x48xf32> to vector<8x32xf32>
    %171 = arith.addf %169, %170 : vector<8x32xf32>
    %172 = arith.negf %171 : vector<8x32xf32>
    %173 = math.exp %172 : vector<8x32xf32>
    %cst_38 = arith.constant 1.000000e+00 : f32
    %174 = vector.broadcast %cst_38 : f32 to vector<8x32xf32>
    %175 = arith.addf %174, %173 : vector<8x32xf32>
    %176 = arith.divf %174, %175 : vector<8x32xf32>
    %177 = vector.extract_strided_slice %176 {offsets = [0, 16], sizes = [8, 16], strides = [1, 1]} : vector<8x32xf32> to vector<8x16xf32>
    %178 = vector.extract_strided_slice %165 {offsets = [0, 32], sizes = [8, 16], strides = [1, 1]} : vector<8x48xf32> to vector<8x16xf32>
    %179 = vector.extract_strided_slice %176 {offsets = [0, 0], sizes = [8, 16], strides = [1, 1]} : vector<8x32xf32> to vector<8x16xf32>
    %180 = vector.extract_strided_slice %168 {offsets = [0, 32], sizes = [8, 16], strides = [1, 1]} : vector<8x48xf32> to vector<8x16xf32>
    %181 = arith.mulf %179, %180 : vector<8x16xf32>
    %182 = arith.addf %178, %181 : vector<8x16xf32>
    %183 = math.tanh %182 : vector<8x16xf32>
    %184 = arith.subf %164, %183 : vector<8x16xf32>
    %185 = arith.mulf %177, %184 : vector<8x16xf32>
    %186 = arith.addf %183, %185 : vector<8x16xf32>
    %187 = vector.extract_strided_slice %49 {offsets = [48, 0], sizes = [8, 48], strides = [1, 1]} : vector<64x48xf32> to vector<8x48xf32>
    %188 = arith.truncf %186 : vector<8x16xf32> to vector<8x16xbf16>
    %cst_39 = arith.constant dense<0.000000e+00> : vector<8x48xf32>
    %189 = tpu.matmul %188, %51, %cst_39 {dimension_numbers = #tpu.dot_dimension_numbers<[1], [0], [0], [1], [0, 0, 1, 1], [], []>} : vector<8x16xbf16>, vector<16x48xbf16>, vector<8x48xf32> -> vector<8x48xf32>
    %190 = arith.addf %189, %53 : vector<8x48xf32>
    %191 = vector.extract_strided_slice %187 {offsets = [0, 0], sizes = [8, 32], strides = [1, 1]} : vector<8x48xf32> to vector<8x32xf32>
    %192 = vector.extract_strided_slice %190 {offsets = [0, 0], sizes = [8, 32], strides = [1, 1]} : vector<8x48xf32> to vector<8x32xf32>
    %193 = arith.addf %191, %192 : vector<8x32xf32>
    %194 = arith.negf %193 : vector<8x32xf32>
    %195 = math.exp %194 : vector<8x32xf32>
    %cst_40 = arith.constant 1.000000e+00 : f32
    %196 = vector.broadcast %cst_40 : f32 to vector<8x32xf32>
    %197 = arith.addf %196, %195 : vector<8x32xf32>
    %198 = arith.divf %196, %197 : vector<8x32xf32>
    %199 = vector.extract_strided_slice %198 {offsets = [0, 16], sizes = [8, 16], strides = [1, 1]} : vector<8x32xf32> to vector<8x16xf32>
    %200 = vector.extract_strided_slice %187 {offsets = [0, 32], sizes = [8, 16], strides = [1, 1]} : vector<8x48xf32> to vector<8x16xf32>
    %201 = vector.extract_strided_slice %198 {offsets = [0, 0], sizes = [8, 16], strides = [1, 1]} : vector<8x32xf32> to vector<8x16xf32>
    %202 = vector.extract_strided_slice %190 {offsets = [0, 32], sizes = [8, 16], strides = [1, 1]} : vector<8x48xf32> to vector<8x16xf32>
    %203 = arith.mulf %201, %202 : vector<8x16xf32>
    %204 = arith.addf %200, %203 : vector<8x16xf32>
    %205 = math.tanh %204 : vector<8x16xf32>
    %206 = arith.subf %186, %205 : vector<8x16xf32>
    %207 = arith.mulf %199, %206 : vector<8x16xf32>
    %208 = arith.addf %205, %207 : vector<8x16xf32>
    %209 = vector.extract_strided_slice %49 {offsets = [56, 0], sizes = [8, 48], strides = [1, 1]} : vector<64x48xf32> to vector<8x48xf32>
    %210 = arith.truncf %208 : vector<8x16xf32> to vector<8x16xbf16>
    %cst_41 = arith.constant dense<0.000000e+00> : vector<8x48xf32>
    %211 = tpu.matmul %210, %51, %cst_41 {dimension_numbers = #tpu.dot_dimension_numbers<[1], [0], [0], [1], [0, 0, 1, 1], [], []>} : vector<8x16xbf16>, vector<16x48xbf16>, vector<8x48xf32> -> vector<8x48xf32>
    %212 = arith.addf %211, %53 : vector<8x48xf32>
    %213 = vector.extract_strided_slice %209 {offsets = [0, 0], sizes = [8, 32], strides = [1, 1]} : vector<8x48xf32> to vector<8x32xf32>
    %214 = vector.extract_strided_slice %212 {offsets = [0, 0], sizes = [8, 32], strides = [1, 1]} : vector<8x48xf32> to vector<8x32xf32>
    %215 = arith.addf %213, %214 : vector<8x32xf32>
    %216 = arith.negf %215 : vector<8x32xf32>
    %217 = math.exp %216 : vector<8x32xf32>
    %cst_42 = arith.constant 1.000000e+00 : f32
    %218 = vector.broadcast %cst_42 : f32 to vector<8x32xf32>
    %219 = arith.addf %218, %217 : vector<8x32xf32>
    %220 = arith.divf %218, %219 : vector<8x32xf32>
    %221 = vector.extract_strided_slice %220 {offsets = [0, 16], sizes = [8, 16], strides = [1, 1]} : vector<8x32xf32> to vector<8x16xf32>
    %222 = vector.extract_strided_slice %209 {offsets = [0, 32], sizes = [8, 16], strides = [1, 1]} : vector<8x48xf32> to vector<8x16xf32>
    %223 = vector.extract_strided_slice %220 {offsets = [0, 0], sizes = [8, 16], strides = [1, 1]} : vector<8x32xf32> to vector<8x16xf32>
    %224 = vector.extract_strided_slice %212 {offsets = [0, 32], sizes = [8, 16], strides = [1, 1]} : vector<8x48xf32> to vector<8x16xf32>
    %225 = arith.mulf %223, %224 : vector<8x16xf32>
    %226 = arith.addf %222, %225 : vector<8x16xf32>
    %227 = math.tanh %226 : vector<8x16xf32>
    %228 = arith.subf %208, %227 : vector<8x16xf32>
    %229 = arith.mulf %221, %228 : vector<8x16xf32>
    %230 = arith.addf %227, %229 : vector<8x16xf32>
    %231 = tpu.concatenate %76, %98, %120, %142, %164, %186, %208, %230 in 0 : vector<8x16xf32>, vector<8x16xf32>, vector<8x16xf32>, vector<8x16xf32>, vector<8x16xf32>, vector<8x16xf32>, vector<8x16xf32>, vector<8x16xf32> -> vector<64x16xf32>
    %232 = arith.truncf %231 : vector<64x16xf32> to vector<64x16xbf16>
    %c0_43 = arith.constant 0 : index
    %c0_44 = arith.constant 0 : index
    %c0_45 = arith.constant 0 : index
    %233 = vector.load %arg7[%c0_43, %c0_44, %c0_45] : memref<1x16x128xbf16, #tpu.memory_space<vmem>>, vector<1x16x128xbf16>
    %234 = vector.shape_cast %233 : vector<1x16x128xbf16> to vector<16x128xbf16>
    %cst_46 = arith.constant dense<0.000000e+00> : vector<64x128xf32>
    %235 = tpu.matmul %232, %234, %cst_46 {dimension_numbers = #tpu.dot_dimension_numbers<[1], [0], [0], [1], [0, 0, 1, 1], [], []>} : vector<64x16xbf16>, vector<16x128xbf16>, vector<64x128xf32> -> vector<64x128xf32>
    %236 = vector.broadcast %9 : vector<1x128xf32> to vector<64x128xf32>
    %237 = arith.addf %235, %236 : vector<64x128xf32>
    %238 = arith.select %14, %237, %43 : vector<64x128xi1>, vector<64x128xf32>
    %c0_i32_47 = arith.constant 0 : i32
    %239 = arith.cmpi eq, %arg0, %c0_i32_47 : i32
    %240 = arith.extui %239 : i1 to i32
    %c0_i32_48 = arith.constant 0 : i32
    %241 = arith.cmpi ne, %240, %c0_i32_48 : i32
    scf.if %241 {
      %c0_52 = arith.constant 0 : index
      %c0_53 = arith.constant 0 : index
      %246 = vector.load %arg10[%c0_52, %c0_53] : memref<64x128xf32, #tpu.memory_space<vmem>>, vector<64x128xf32>
      tpu.vector_store %arg10[%c0_52, %c0_53], %238 {strides = array<i32>} : memref<64x128xf32, #tpu.memory_space<vmem>>, vector<64x128xf32>,
    } else {
    }
    %c0_49 = arith.constant 0 : index
    %c0_50 = arith.constant 0 : index
    %242 = vector.load %arg11[%c0_49, %c0_50] : memref<64x128xf32, #tpu.memory_space<vmem>>, vector<64x128xf32>
    tpu.vector_store %arg11[%c0_49, %c0_50], %238 {strides = array<i32>} : memref<64x128xf32, #tpu.memory_space<vmem>>, vector<64x128xf32>,
    %c2_i32 = arith.constant 2 : i32
    %243 = arith.cmpi eq, %arg0, %c2_i32 : i32
    %244 = arith.extui %243 : i1 to i32
    %c0_i32_51 = arith.constant 0 : i32
    %245 = arith.cmpi ne, %244, %c0_i32_51 : i32
    scf.if %245 {
      %c0_52 = arith.constant 0 : index
      %c0_53 = arith.constant 0 : index
      %246 = vector.load %arg10[%c0_52, %c0_53] : memref<64x128xf32, #tpu.memory_space<vmem>>, vector<64x128xf32>
      %247 = arith.addf %246, %238 : vector<64x128xf32>
      %c0_54 = arith.constant 0 : index
      %c0_55 = arith.constant 0 : index
      %248 = vector.load %arg9[%c0_54, %c0_55] : memref<64x128xf32, #tpu.memory_space<vmem>>, vector<64x128xf32>
      tpu.vector_store %arg9[%c0_54, %c0_55], %247 {strides = array<i32>} : memref<64x128xf32, #tpu.memory_space<vmem>>, vector<64x128xf32>,
    } else {
    }
    return
  }
  func.func @transform_0(%arg0: i32) -> (i32, i32) {
    %c0_i32 = arith.constant 0 : i32
    %c0_i32_0 = arith.constant 0 : i32
    %c0_i32_1 = arith.constant 0 : i32
    return %c0_i32, %c0_i32_0 : i32, i32
  }
  func.func @transform_1(%arg0: i32) -> (i32, i32) {
    %c0_i32 = arith.constant 0 : i32
    %c0_i32_0 = arith.constant 0 : i32
    %c0_i32_1 = arith.constant 0 : i32
    return %c0_i32, %c0_i32_0 : i32, i32
  }
  func.func @transform_2(%arg0: i32) -> (i32, i32, i32) {
    %c0_i32 = arith.constant 0 : i32
    %c0_i32_0 = arith.constant 0 : i32
    %c0_i32_1 = arith.constant 0 : i32
    return %arg0, %c0_i32, %c0_i32_0 : i32, i32, i32
  }
  func.func @transform_3(%arg0: i32) -> (i32, i32, i32) {
    %c0_i32 = arith.constant 0 : i32
    %c0_i32_0 = arith.constant 0 : i32
    %c0_i32_1 = arith.constant 0 : i32
    return %arg0, %c0_i32, %c0_i32_0 : i32, i32, i32
  }
  func.func @transform_4(%arg0: i32) -> (i32, i32, i32) {
    %c0_i32 = arith.constant 0 : i32
    %c0_i32_0 = arith.constant 0 : i32
    %c0_i32_1 = arith.constant 0 : i32
    return %arg0, %c0_i32, %c0_i32_0 : i32, i32, i32
  }
  func.func @transform_5(%arg0: i32) -> (i32, i32, i32) {
    %c0_i32 = arith.constant 0 : i32
    %c0_i32_0 = arith.constant 0 : i32
    %c0_i32_1 = arith.constant 0 : i32
    return %arg0, %c0_i32, %c0_i32_0 : i32, i32, i32
  }
  func.func @transform_6(%arg0: i32) -> (i32, i32, i32) {
    %c0_i32 = arith.constant 0 : i32
    %c0_i32_0 = arith.constant 0 : i32
    %c0_i32_1 = arith.constant 0 : i32
    return %arg0, %c0_i32, %c0_i32_0 : i32, i32, i32
  }
  func.func @transform_7(%arg0: i32) -> (i32, i32, i32) {
    %c0_i32 = arith.constant 0 : i32
    %c0_i32_0 = arith.constant 0 : i32
    %c0_i32_1 = arith.constant 0 : i32
    return %arg0, %c0_i32, %c0_i32_0 : i32, i32, i32
  }
  func.func @transform_8(%arg0: i32) -> (i32, i32) {
    %c0_i32 = arith.constant 0 : i32
    %c0_i32_0 = arith.constant 0 : i32
    %c0_i32_1 = arith.constant 0 : i32
    return %c0_i32, %c0_i32_0 : i32, i32
  }
}

</mosaic_0001>

<llo_original>
// kernel: gcn_layer.1
$region0: #{gcn_layer.1}
  #allocation0 [shape = 'u32[]', space=smem, size = 0x4, offset = 0x4, fixed_abs, tag = 'smem constant byte address 0x4 - core index']
  #allocation1 [shape = 'u32[72,128]{1,0:T(1,128)}', space=vmem, size = 0x9000, scoped, tag = 'internal scratch']
  #allocation2 [shape = 'f32[64,128]{1,0:T(8,128)}', space=vmem, size = 0x8000, scoped, tag = 'scratch operand']
  #allocation3 [shape = 'f32[64,128]{1,0:T(8,128)}', space=vmem, size = 0x8000, scoped, tag = 'scratch operand']
  %s0 = inlined_call_operand.vmem [shape: f32[64,128], index: 0, kind: input, shape index: {}]
  %s1 = inlined_call_operand.vmem [shape: f32[64,128], index: 1, kind: input, shape index: {}]
  %s2 = inlined_call_operand.vmem [shape: bf16[3,128,128], index: 2, kind: input, shape index: {}]
  %s3 = inlined_call_operand.vmem [shape: bf16[3,128,128], index: 3, kind: input, shape index: {}]
  %s4 = inlined_call_operand.vmem [shape: bf16[3,128,48], index: 4, kind: input, shape index: {}]
  %s5 = inlined_call_operand.vmem [shape: bf16[3,16,48], index: 5, kind: input, shape index: {}]
  %s6 = inlined_call_operand.vmem [shape: bf16[3,16,128], index: 6, kind: input, shape index: {}]
  %s7 = inlined_call_operand.vmem [shape: f32[3,4,128], index: 7, kind: input, shape index: {}]
  %s8 = inlined_call_operand.vmem [shape: f32[64,128], index: 8, kind: output, shape index: {}]
  %s9 = sld [smem:[#allocation0]]
  $region77: #{gcn_layer.1} parent=0
    _
  %s11 = ssub.s32 1, %s9
  %s12 = scalar_select 0, %s11, %s9
  loop: start=0, step=1, limit=5
  $region2: #{gcn_layer.1} parent=0 // loop_pre_header
    _
  $region3: #{gcn_layer.1} parent=0 // loop_header
    %s14 = sphi 0, %s18
    %p15 = scmp.ge.s32.totalorder %s14, 5
    %s22 = sphi 0, %s22
    %s24 = sphi 0, %s22
    %s25 = sphi 0, %s24
    %s39 = sphi 0, %s25
    %s43 = sphi 0, %s43
    %s45 = sphi 0, %s43
    %s46 = sphi 0, %s45
    %s60 = sphi 0, %s46
    %s66 = sphi 0, %s68
    %s69 = sphi 0, %s66
    %s70 = sphi 0, %s69
    %s86 = sphi 0, %s70
    %s92 = sphi 0, %s94
    %s95 = sphi 0, %s92
    %s96 = sphi 0, %s95
    %s112 = sphi 0, %s96
    %s118 = sphi 0, %s120
    %s121 = sphi 0, %s118
    %s122 = sphi 0, %s121
    %s138 = sphi 0, %s122
    %s144 = sphi 0, %s146
    %s147 = sphi 0, %s144
    %s148 = sphi 0, %s147
    %s164 = sphi 0, %s148
    %s170 = sphi 0, %s172
    %s173 = sphi 0, %s170
    %s174 = sphi 0, %s173
    %s190 = sphi 0, %s174
    %s196 = sphi 0, %s198
    %s199 = sphi 0, %s196
    %s200 = sphi 0, %s199
    %s216 = sphi 0, %s200
    %s220 = sphi 0, %s220
    %s222 = sphi 0, %s220
    %s223 = sphi 0, %s222
    %s237 = sphi 0, %s223
  $region4: #{gcn_layer.1} parent=0 // loop_header_branch
    %17 = sbr.rel (%p15) target = $region8
  $region5: #{gcn_layer.1} parent=0 // loop_body
    %s19 = ssub.s32 %s14, 1
    %s20 = ssub.s32 %s14, 2
    %s21 = sadd.s32 %s14, 1
    %s23 = sadd.s32 %s22, 1
    %p26 = scmp.eq.s32.totalorder %s14, 2
    %p27 = scmp.ne.s32.totalorder %s22, %s24
    %p28 = scmp.eq.s32.totalorder %s14, 0
    %p29 = por %p27, %p28
    %p30 = scmp.ne.s32.totalorder %s22, %s24
    %p31 = scmp.eq.s32.totalorder %s19, 2
    %p32 = por %p30, %p31
    %p33 = scmp.ne.s32.totalorder %s24, %s25
    %p34 = scmp.eq.s32.totalorder %s19, 0
    %p35 = por %p33, %p34
    %p36 = scmp.ne.s32.totalorder %s24, %s25
    %p37 = scmp.eq.s32.totalorder %s20, 2
    %p38 = por %p36, %p37
    %p40 = scmp.ne.s32.totalorder %s25, %s39
    %p41 = scmp.eq.s32.totalorder %s20, 0
    %p42 = por %p40, %p41
    %s44 = sadd.s32 %s43, 1
    %p47 = scmp.eq.s32.totalorder %s14, 2
    %p48 = scmp.ne.s32.totalorder %s43, %s45
    %p49 = scmp.eq.s32.totalorder %s14, 0
    %p50 = por %p48, %p49
    %p51 = scmp.ne.s32.totalorder %s43, %s45
    %p52 = scmp.eq.s32.totalorder %s19, 2
    %p53 = por %p51, %p52
    %p54 = scmp.ne.s32.totalorder %s45, %s46
    %p55 = scmp.eq.s32.totalorder %s19, 0
    %p56 = por %p54, %p55
    %p57 = scmp.ne.s32.totalorder %s45, %s46
    %p58 = scmp.eq.s32.totalorder %s20, 2
    %p59 = por %p57, %p58
    %p61 = scmp.ne.s32.totalorder %s46, %s60
    %p62 = scmp.eq.s32.totalorder %s20, 0
    %p63 = por %p61, %p62
    %s64 = ssub.s32 %s14, %s21
    %p65 = scmp.eq.s32.totalorder %s64, 0
    %s67 = sadd.s32 %s66, 1
    %s68 = scalar_select %p65, %s66, %s67
    %p71 = pneg %p65
    %p72 = scmp.eq.s32.totalorder %s14, 2
    %p73 = por %p71, %p72
    %p74 = scmp.ne.s32.totalorder %s66, %s69
    %p75 = scmp.eq.s32.totalorder %s14, 0
    %p76 = por %p74, %p75
    %p77 = scmp.ne.s32.totalorder %s66, %s69
    %p78 = scmp.eq.s32.totalorder %s19, 2
    %p79 = por %p77, %p78
    %p80 = scmp.ne.s32.totalorder %s69, %s70
    %p81 = scmp.eq.s32.totalorder %s19, 0
    %p82 = por %p80, %p81
    %p83 = scmp.ne.s32.totalorder %s69, %s70
    %p84 = scmp.eq.s32.totalorder %s20, 2
    %p85 = por %p83, %p84
    %p87 = scmp.ne.s32.totalorder %s70, %s86
    %p88 = scmp.eq.s32.totalorder %s20, 0
    %p89 = por %p87, %p88
    %s90 = ssub.s32 %s14, %s21
    %p91 = scmp.eq.s32.totalorder %s90, 0
    %s93 = sadd.s32 %s92, 1
    %s94 = scalar_select %p91, %s92, %s93
    %p97 = pneg %p91
    %p98 = scmp.eq.s32.totalorder %s14, 2
    %p99 = por %p97, %p98
    %p100 = scmp.ne.s32.totalorder %s92, %s95
    %p101 = scmp.eq.s32.totalorder %s14, 0
    %p102 = por %p100, %p101
    %p103 = scmp.ne.s32.totalorder %s92, %s95
    %p104 = scmp.eq.s32.totalorder %s19, 2
    %p105 = por %p103, %p104
    %p106 = scmp.ne.s32.totalorder %s95, %s96
    %p107 = scmp.eq.s32.totalorder %s19, 0
    %p108 = por %p106, %p107
    %p109 = scmp.ne.s32.totalorder %s95, %s96
    %p110 = scmp.eq.s32.totalorder %s20, 2
    %p111 = por %p109, %p110
    %p113 = scmp.ne.s32.totalorder %s96, %s112
    %p114 = scmp.eq.s32.totalorder %s20, 0
    %p115 = por %p113, %p114
    %s116 = ssub.s32 %s14, %s21
    %p117 = scmp.eq.s32.totalorder %s116, 0
    %s119 = sadd.s32 %s118, 1
    %s120 = scalar_select %p117, %s118, %s119
    %p123 = pneg %p117
    %p124 = scmp.eq.s32.totalorder %s14, 2
    %p125 = por %p123, %p124
    %p126 = scmp.ne.s32.totalorder %s118, %s121
    %p127 = scmp.eq.s32.totalorder %s14, 0
    %p128 = por %p126, %p127
    %p129 = scmp.ne.s32.totalorder %s118, %s121
    %p130 = scmp.eq.s32.totalorder %s19, 2
    %p131 = por %p129, %p130
    %p132 = scmp.ne.s32.totalorder %s121, %s122
    %p133 = scmp.eq.s32.totalorder %s19, 0
    %p134 = por %p132, %p133
    %p135 = scmp.ne.s32.totalorder %s121, %s122
    %p136 = scmp.eq.s32.totalorder %s20, 2
    %p137 = por %p135, %p136
    %p139 = scmp.ne.s32.totalorder %s122, %s138
    %p140 = scmp.eq.s32.totalorder %s20, 0
    %p141 = por %p139, %p140
    %s142 = ssub.s32 %s14, %s21
    %p143 = scmp.eq.s32.totalorder %s142, 0
    %s145 = sadd.s32 %s144, 1
    %s146 = scalar_select %p143, %s144, %s145
    %p149 = pneg %p143
    %p150 = scmp.eq.s32.totalorder %s14, 2
    %p151 = por %p149, %p150
    %p152 = scmp.ne.s32.totalorder %s144, %s147
    %p153 = scmp.eq.s32.totalorder %s14, 0
    %p154 = por %p152, %p153
    %p155 = scmp.ne.s32.totalorder %s144, %s147
    %p156 = scmp.eq.s32.totalorder %s19, 2
    %p157 = por %p155, %p156
    %p158 = scmp.ne.s32.totalorder %s147, %s148
    %p159 = scmp.eq.s32.totalorder %s19, 0
    %p160 = por %p158, %p159
    %p161 = scmp.ne.s32.totalorder %s147, %s148
    %p162 = scmp.eq.s32.totalorder %s20, 2
    %p163 = por %p161, %p162
    %p165 = scmp.ne.s32.totalorder %s148, %s164
    %p166 = scmp.eq.s32.totalorder %s20, 0
    %p167 = por %p165, %p166
    %s168 = ssub.s32 %s14, %s21
    %p169 = scmp.eq.s32.totalorder %s168, 0
    %s171 = sadd.s32 %s170, 1
    %s172 = scalar_select %p169, %s170, %s171
    %p175 = pneg %p169
    %p176 = scmp.eq.s32.totalorder %s14, 2
    %p177 = por %p175, %p176
    %p178 = scmp.ne.s32.totalorder %s170, %s173
    %p179 = scmp.eq.s32.totalorder %s14, 0
    %p180 = por %p178, %p179
    %p181 = scmp.ne.s32.totalorder %s170, %s173
    %p182 = scmp.eq.s32.totalorder %s19, 2
    %p183 = por %p181, %p182
    %p184 = scmp.ne.s32.totalorder %s173, %s174
    %p185 = scmp.eq.s32.totalorder %s19, 0
    %p186 = por %p184, %p185
    %p187 = scmp.ne.s32.totalorder %s173, %s174
    %p188 = scmp.eq.s32.totalorder %s20, 2
    %p189 = por %p187, %p188
    %p191 = scmp.ne.s32.totalorder %s174, %s190
    %p192 = scmp.eq.s32.totalorder %s20, 0
    %p193 = por %p191, %p192
    %s194 = ssub.s32 %s14, %s21
    %p195 = scmp.eq.s32.totalorder %s194, 0
    %s197 = sadd.s32 %s196, 1
    %s198 = scalar_select %p195, %s196, %s197
    %p201 = pneg %p195
    %p202 = scmp.eq.s32.totalorder %s14, 2
    %p203 = por %p201, %p202
    %p204 = scmp.ne.s32.totalorder %s196, %s199
    %p205 = scmp.eq.s32.totalorder %s14, 0
    %p206 = por %p204, %p205
    %p207 = scmp.ne.s32.totalorder %s196, %s199
    %p208 = scmp.eq.s32.totalorder %s19, 2
    %p209 = por %p207, %p208
    %p210 = scmp.ne.s32.totalorder %s199, %s200
    %p211 = scmp.eq.s32.totalorder %s19, 0
    %p212 = por %p210, %p211
    %p213 = scmp.ne.s32.totalorder %s199, %s200
    %p214 = scmp.eq.s32.totalorder %s20, 2
    %p215 = por %p213, %p214
    %p217 = scmp.ne.s32.totalorder %s200, %s216
    %p218 = scmp.eq.s32.totalorder %s20, 0
    %p219 = por %p217, %p218
    %s221 = sadd.s32 %s220, 1
    %p224 = scmp.eq.s32.totalorder %s14, 2
    %p225 = scmp.ne.s32.totalorder %s220, %s222
    %p226 = scmp.eq.s32.totalorder %s14, 0
    %p227 = por %p225, %p226
    %p228 = scmp.ne.s32.totalorder %s220, %s222
    %p229 = scmp.eq.s32.totalorder %s19, 2
    %p230 = por %p228, %p229
    %p231 = scmp.ne.s32.totalorder %s222, %s223
    %p232 = scmp.eq.s32.totalorder %s19, 0
    %p233 = por %p231, %p232
    %p234 = scmp.ne.s32.totalorder %s222, %s223
    %p235 = scmp.eq.s32.totalorder %s20, 2
    %p236 = por %p234, %p235
    %p238 = scmp.ne.s32.totalorder %s223, %s237
    %p239 = scmp.eq.s32.totalorder %s20, 0
    %p240 = por %p238, %p239
    %p241 = scmp.le.s32.totalorder 1, %s14
    %p242 = scmp.lt.s32.totalorder %s14, 4
    %p243 = pnand %p241, %p242
    %p244 = pneg %p243
    // Predicated region
    $region9: #{gcn_layer.1} parent=5 // pred_check
      _
    $region10: #{gcn_layer.1} parent=5 // pred_check_branch
      %246 = sbr.rel (%p243) target = $region12
    $region11: #{gcn_layer.1} parent=5 // pred_region
      %s247 = ssub.s32 %s14, 1
      // Predicated region
      $region13: #{gcn_layer.1} parent=11 // pred_check
        %p248 = pneg %p35
      $region14: #{gcn_layer.1} parent=11 // pred_check_branch
        %250 = sbr.rel (%p248) target = $region16
      $region15: #{gcn_layer.1} parent=11 // pred_region
        _
      $region16: #{gcn_layer.1} parent=11 // pred_fallthru
        _
      // Predicated region
      $region17: #{gcn_layer.1} parent=11 // pred_check
        %p251 = pneg %p56
      $region18: #{gcn_layer.1} parent=11 // pred_check_branch
        %253 = sbr.rel (%p251) target = $region20
      $region19: #{gcn_layer.1} parent=11 // pred_region
        _
      $region20: #{gcn_layer.1} parent=11 // pred_fallthru
        _
    $region12: #{gcn_layer.1} parent=5 // pred_fallthru
      _
    %p254 = scmp.lt.s32.totalorder %s14, 3
    // Predicated region
    $region21: #{gcn_layer.1} parent=5 // pred_check
      %p255 = pneg %p254
    $region22: #{gcn_layer.1} parent=5 // pred_check_branch
      %257 = sbr.rel (%p255) target = $region24
    $region23: #{gcn_layer.1} parent=5 // pred_region
      // Predicated region
      $region25: #{gcn_layer.1} parent=23 // pred_check
        %p258 = pneg %p76
      $region26: #{gcn_layer.1} parent=23 // pred_check_branch
        %260 = sbr.rel (%p258) target = $region28
      $region27: #{gcn_layer.1} parent=23 // pred_region
        %p261 = scmp.lt.s32.totalorder %s14, 2
        %s262 = scalar_select %p261, %s14, 2
        %s263 = smul.addr %s262, 16
        %s264 = smul.addr %s263, 4
        %s265 = scalar_lea.vmem %s2, %s264
      $region28: #{gcn_layer.1} parent=23 // pred_fallthru
        _
      // Predicated region
      $region29: #{gcn_layer.1} parent=23 // pred_check
        %p266 = pneg %p102
      $region30: #{gcn_layer.1} parent=23 // pred_check_branch
        %268 = sbr.rel (%p266) target = $region32
      $region31: #{gcn_layer.1} parent=23 // pred_region
        %p269 = scmp.lt.s32.totalorder %s14, 2
        %s270 = scalar_select %p269, %s14, 2
        %s271 = smul.addr %s270, 16
        %s272 = smul.addr %s271, 4
        %s273 = scalar_lea.vmem %s3, %s272
      $region32: #{gcn_layer.1} parent=23 // pred_fallthru
        _
      // Predicated region
      $region33: #{gcn_layer.1} parent=23 // pred_check
        %p274 = pneg %p128
      $region34: #{gcn_layer.1} parent=23 // pred_check_branch
        %276 = sbr.rel (%p274) target = $region36
      $region35: #{gcn_layer.1} parent=23 // pred_region
        %p277 = scmp.lt.s32.totalorder %s14, 2
        %s278 = scalar_select %p277, %s14, 2
        %s279 = smul.addr %s278, 16
        %s280 = smul.addr %s279, 4
        %s281 = scalar_lea.vmem %s4, %s280
      $region36: #{gcn_layer.1} parent=23 // pred_fallthru
        _
      // Predicated region
      $region37: #{gcn_layer.1} parent=23 // pred_check
        %p282 = pneg %p154
      $region38: #{gcn_layer.1} parent=23 // pred_check_branch
        %284 = sbr.rel (%p282) target = $region40
      $region39: #{gcn_layer.1} parent=23 // pred_region
        %p285 = scmp.lt.s32.totalorder %s14, 2
        %s286 = scalar_select %p285, %s14, 2
        %s287 = smul.addr %s286, 2
        %s288 = smul.addr %s287, 4
        %s289 = scalar_lea.vmem %s5, %s288
      $region40: #{gcn_layer.1} parent=23 // pred_fallthru
        _
      // Predicated region
      $region41: #{gcn_layer.1} parent=23 // pred_check
        %p290 = pneg %p180
      $region42: #{gcn_layer.1} parent=23 // pred_check_branch
        %292 = sbr.rel (%p290) target = $region44
      $region43: #{gcn_layer.1} parent=23 // pred_region
        %p293 = scmp.lt.s32.totalorder %s14, 2
        %s294 = scalar_select %p293, %s14, 2
        %s295 = smul.addr %s294, 2
        %s296 = smul.addr %s295, 4
        %s297 = scalar_lea.vmem %s6, %s296
      $region44: #{gcn_layer.1} parent=23 // pred_fallthru
        _
      // Predicated region
      $region45: #{gcn_layer.1} parent=23 // pred_check
        %p298 = pneg %p206
      $region46: #{gcn_layer.1} parent=23 // pred_check_branch
        %300 = sbr.rel (%p298) target = $region48
      $region47: #{gcn_layer.1} parent=23 // pred_region
        %p301 = scmp.lt.s32.totalorder %s14, 2
        %s302 = scalar_select %p301, %s14, 2
        %s303 = smul.addr %s302, 4
        %s304 = scalar_lea.vmem %s7, %s303
      $region48: #{gcn_layer.1} parent=23 // pred_fallthru
        _
    $region24: #{gcn_layer.1} parent=5 // pred_fallthru
      _
    %p305 = scmp.le.s32.totalorder 1, %s14
    %p306 = scmp.lt.s32.totalorder %s14, 4
    %p307 = pnand %p305, %p306
    %p308 = pneg %p307
    // Predicated region
    $region49: #{gcn_layer.1} parent=5 // pred_check
      _
    $region50: #{gcn_layer.1} parent=5 // pred_check_branch
      %310 = sbr.rel (%p307) target = $region52
    $region51: #{gcn_layer.1} parent=5 // pred_region
      %s311 = ssub.s32 %s14, 1
      %p312 = pneg %p35
      %p313 = pneg %p32
      %p314 = pneg %p56
      %p315 = pneg %p53
      %p316 = scmp.lt.s32.totalorder %s19, 2
      %s317 = scalar_select %p316, %s19, 2
      %s318 = smul.addr %s317, 16
      %s319 = smul.addr %s318, 4
      %s320 = scalar_lea.vmem %s2, %s319
      %p321 = pneg %p82
      %p322 = pneg %p79
      %p323 = scmp.lt.s32.totalorder %s19, 2
      %s324 = scalar_select %p323, %s19, 2
      %s325 = smul.addr %s324, 16
      %s326 = smul.addr %s325, 4
      %s327 = scalar_lea.vmem %s3, %s326
      %p328 = pneg %p108
      %p329 = pneg %p105
      %p330 = scmp.lt.s32.totalorder %s19, 2
      %s331 = scalar_select %p330, %s19, 2
      %s332 = smul.addr %s331, 16
      %s333 = smul.addr %s332, 4
      %s334 = scalar_lea.vmem %s4, %s333
      %p335 = pneg %p134
      %p336 = pneg %p131
      %p337 = scmp.lt.s32.totalorder %s19, 2
      %s338 = scalar_select %p337, %s19, 2
      %s339 = smul.addr %s338, 2
      %s340 = smul.addr %s339, 4
      %s341 = scalar_lea.vmem %s5, %s340
      %p342 = pneg %p160
      %p343 = pneg %p157
      %p344 = scmp.lt.s32.totalorder %s19, 2
      %s345 = scalar_select %p344, %s19, 2
      %s346 = smul.addr %s345, 2
      %s347 = smul.addr %s346, 4
      %s348 = scalar_lea.vmem %s6, %s347
      %p349 = pneg %p186
      %p350 = pneg %p183
      %p351 = scmp.lt.s32.totalorder %s19, 2
      %s352 = scalar_select %p351, %s19, 2
      %s353 = smul.addr %s352, 4
      %s354 = scalar_lea.vmem %s7, %s353
      %p355 = pneg %p212
      %p356 = pneg %p209
      %p357 = pneg %p233
      %p358 = pneg %p230
      %p359 = scmp.lt.s32.totalorder %s19, 2
      %s360 = scalar_select %p359, %s19, 2
      %s361 = smul.addr %s360, 16
      %s362 = smul.addr %s361, 4
      %s363 = scalar_lea.vmem %s2, %s362
      %p364 = scmp.lt.s32.totalorder %s19, 2
      %s365 = scalar_select %p364, %s19, 2
      %s366 = smul.addr %s365, 16
      %s367 = smul.addr %s366, 4
      %s368 = scalar_lea.vmem %s3, %s367
      %p369 = scmp.lt.s32.totalorder %s19, 2
      %s370 = scalar_select %p369, %s19, 2
      %s371 = smul.addr %s370, 16
      %s372 = smul.addr %s371, 4
      %s373 = scalar_lea.vmem %s4, %s372
      %p374 = scmp.lt.s32.totalorder %s19, 2
      %s375 = scalar_select %p374, %s19, 2
      %s376 = smul.addr %s375, 2
      %s377 = smul.addr %s376, 4
      %s378 = scalar_lea.vmem %s5, %s377
      %p379 = scmp.lt.s32.totalorder %s19, 2
      %s380 = scalar_select %p379, %s19, 2
      %s381 = smul.addr %s380, 2
      %s382 = smul.addr %s381, 4
      %s383 = scalar_lea.vmem %s6, %s382
      %p384 = scmp.lt.s32.totalorder %s19, 2
      %s385 = scalar_select %p384, %s19, 2
      %s386 = smul.addr %s385, 4
      %s387 = scalar_lea.vmem %s7, %s386
      %p389 = scmp.eq.s32.totalorder %s19, 0
      // Predicated region
      $region53: #{gcn_layer.1} parent=51 // pred_check
        %p390 = pneg %p389
      $region54: #{gcn_layer.1} parent=51 // pred_check_branch
        %392 = sbr.rel (%p390) target = $region56
      $region55: #{gcn_layer.1} parent=51 // pred_region
        %v393 = vld [vmem:[%s0] sm:$0xff]
        %v394 = vld [vmem:[%s0 + $0x8] sm:$0xff]
        %v395 = vld [vmem:[%s0 + $0x10] sm:$0xff]
        %v396 = vld [vmem:[%s0 + $0x18] sm:$0xff]
        %v397 = vld [vmem:[%s0 + $0x20] sm:$0xff]
        %v398 = vld [vmem:[%s0 + $0x28] sm:$0xff]
        %v399 = vld [vmem:[%s0 + $0x30] sm:$0xff]
        %v400 = vld [vmem:[%s0 + $0x38] sm:$0xff]
        %401 = vst [vmem:[#allocation3] sm:$0xff] %v393
        %402 = vst [vmem:[#allocation3 + $0x8] sm:$0xff] %v394
        %403 = vst [vmem:[#allocation3 + $0x10] sm:$0xff] %v395
        %404 = vst [vmem:[#allocation3 + $0x18] sm:$0xff] %v396
        %405 = vst [vmem:[#allocation3 + $0x20] sm:$0xff] %v397
        %406 = vst [vmem:[#allocation3 + $0x28] sm:$0xff] %v398
        %407 = vst [vmem:[#allocation3 + $0x30] sm:$0xff] %v399
        %408 = vst [vmem:[#allocation3 + $0x38] sm:$0xff] %v400
      $region56: #{gcn_layer.1} parent=51 // pred_fallthru
        _
      %v409 = vld [vmem:[#allocation3] sm:$0xff]
      %v410 = vld [vmem:[#allocation3 + $0x8] sm:$0xff]
      %v411 = vld [vmem:[#allocation3 + $0x10] sm:$0xff]
      %v412 = vld [vmem:[#allocation3 + $0x18] sm:$0xff]
      %v413 = vld [vmem:[#allocation3 + $0x20] sm:$0xff]
      %v414 = vld [vmem:[#allocation3 + $0x28] sm:$0xff]
      %v415 = vld [vmem:[#allocation3 + $0x30] sm:$0xff]
      %v416 = vld [vmem:[#allocation3 + $0x38] sm:$0xff]
      %v417 = vld [vmem:[%s387] sm:$0xf]
      %v418 = vlaneseq
      %v419 = vand.u32 %v418, 127
      %vm420 = vcmp.lt.s32.totalorder %v419, 16
      %vm421 = vcmp.lt.s32.totalorder %v419, 8
      %v422 = vld [vmem:[%s1] sm:$0xff]
      %v423 = vld [vmem:[%s1 + $0x8] sm:$0xff]
      %v424 = vld [vmem:[%s1 + $0x10] sm:$0xff]
      %v425 = vld [vmem:[%s1 + $0x18] sm:$0xff]
      %v426 = vld [vmem:[%s1 + $0x20] sm:$0xff]
      %v427 = vld [vmem:[%s1 + $0x28] sm:$0xff]
      %v428 = vld [vmem:[%s1 + $0x30] sm:$0xff]
      %v429 = vld [vmem:[%s1 + $0x38] sm:$0xff]
      %v430 = vmul.f32 %v409, %v422
      %v431 = vmul.f32 %v410, %v423
      %v432 = vmul.f32 %v411, %v424
      %v433 = vmul.f32 %v412, %v425
      %v434 = vmul.f32 %v413, %v426
      %v435 = vmul.f32 %v414, %v427
      %v436 = vmul.f32 %v415, %v428
      %v437 = vmul.f32 %v416, %v429
      %v438 = vpack.c.bf16 %v431, %v430
      %v439 = vpack.c.bf16 %v433, %v432
      %v440 = vpack.c.bf16 %v435, %v434
      %v441 = vpack.c.bf16 %v437, %v436
      %v442 = vld [vmem:[%s363] sm:$0xf]
      %v443 = vld [vmem:[%s363 + $0x4] sm:$0xf]
      %v444 = vld [vmem:[%s363 + $0x8] sm:$0xf]
      %v445 = vld [vmem:[%s363 + $0xc] sm:$0xf]
      %v446 = vld [vmem:[%s363 + $0x10] sm:$0xf]
      %v447 = vld [vmem:[%s363 + $0x14] sm:$0xf]
      %v448 = vld [vmem:[%s363 + $0x18] sm:$0xf]
      %v449 = vld [vmem:[%s363 + $0x1c] sm:$0xf]
      %v450 = vld [vmem:[%s363 + $0x20] sm:$0xf]
      %v451 = vld [vmem:[%s363 + $0x24] sm:$0xf]
      %v452 = vld [vmem:[%s363 + $0x28] sm:$0xf]
      %v453 = vld [vmem:[%s363 + $0x2c] sm:$0xf]
      %v454 = vld [vmem:[%s363 + $0x30] sm:$0xf]
      %v455 = vld [vmem:[%s363 + $0x34] sm:$0xf]
      %v456 = vld [vmem:[%s363 + $0x38] sm:$0xf]
      %v457 = vld [vmem:[%s363 + $0x3c] sm:$0xf]
      %v474 = vunpack.c.l.b16 %v442
      %v475 = vunpack.c.l.b16 %v443
      %v476 = vunpack.c.l.b16 %v444
      %v477 = vunpack.c.l.b16 %v445
      %v478 = vunpack.c.l.b16 %v446
      %v479 = vunpack.c.l.b16 %v447
      %v480 = vunpack.c.l.b16 %v448
      %v481 = vunpack.c.l.b16 %v449
      %v482 = vunpack.c.l.b16 %v450
      %v483 = vunpack.c.l.b16 %v451
      %v484 = vunpack.c.l.b16 %v452
      %v485 = vunpack.c.l.b16 %v453
      %v486 = vunpack.c.l.b16 %v454
      %v487 = vunpack.c.l.b16 %v455
      %v488 = vunpack.c.l.b16 %v456
      %v489 = vunpack.c.l.b16 %v457
      %v490 = vpack.c.b16 %v475, %v474
      %v491 = vpack.c.b16 %v477, %v476
      %v492 = vpack.c.b16 %v479, %v478
      %v493 = vpack.c.b16 %v481, %v480
      %v494 = vpack.c.b16 %v483, %v482
      %v495 = vpack.c.b16 %v485, %v484
      %v496 = vpack.c.b16 %v487, %v486
      %v497 = vpack.c.b16 %v489, %v488
      %506 = vmatpush.bf16.msra.mxu0 %v497
      %507 = vmatpush.bf16.msra.mxu0 %v496
      %508 = vmatpush.bf16.msra.mxu0 %v495
      %509 = vmatpush.bf16.msra.mxu0 %v494
      %510 = vmatpush.bf16.msra.mxu0 %v493
      %511 = vmatpush.bf16.msra.mxu0 %v492
      %512 = vmatpush.bf16.msra.mxu0 %v491
      %513 = vmatpush.bf16.msra.mxu0 %v490
      %514 = vmatmul.bf16.gmra.mxu0 %v438
      %v515 = vpop.f32.mrf.mxu0
      %v516 = vadd.f32 0.0, %v515
      %v517 = vpop.f32.mrf.mxu0
      %v518 = vadd.f32 0.0, %v517
      %519 = vmatmul.bf16.gmra.mxu0 %v439
      %v520 = vpop.f32.mrf.mxu0
      %v521 = vadd.f32 0.0, %v520
      %v522 = vpop.f32.mrf.mxu0
      %v523 = vadd.f32 0.0, %v522
      %524 = vmatmul.bf16.gmra.mxu0 %v440
      %v525 = vpop.f32.mrf.mxu0
      %v526 = vadd.f32 0.0, %v525
      %v527 = vpop.f32.mrf.mxu0
      %v528 = vadd.f32 0.0, %v527
      %529 = vmatmul.bf16.gmra.mxu0 %v441
      %v530 = vpop.f32.mrf.mxu0
      %v531 = vadd.f32 0.0, %v530
      %v532 = vpop.f32.mrf.mxu0
      %v533 = vadd.f32 0.0, %v532
      %534 = vdwg.mxu0
      %v535 = vsel %vm420, %v516, -1e+30
      %v536 = vsel %vm420, %v518, -1e+30
      %v537 = vsel %vm420, %v521, -1e+30
      %v538 = vsel %vm420, %v523, -1e+30
      %v539 = vsel %vm420, %v526, -1e+30
      %v540 = vsel %vm420, %v528, -1e+30
      %v541 = vsel %vm420, %v531, -1e+30
      %v542 = vsel %vm420, %v533, -1e+30
      %543 = vmax.xlane.f32.xlu0 %v535
      %v544 = vpop.xlane.xlu0 %543
      %545 = vmax.xlane.f32.xlu0 %v536
      %v546 = vpop.xlane.xlu0 %545
      %547 = vmax.xlane.f32.xlu0 %v537
      %v548 = vpop.xlane.xlu0 %547
      %549 = vmax.xlane.f32.xlu0 %v538
      %v550 = vpop.xlane.xlu0 %549
      %551 = vmax.xlane.f32.xlu0 %v539
      %v552 = vpop.xlane.xlu0 %551
      %553 = vmax.xlane.f32.xlu0 %v540
      %v554 = vpop.xlane.xlu0 %553
      %555 = vmax.xlane.f32.xlu0 %v541
      %v556 = vpop.xlane.xlu0 %555
      %557 = vmax.xlane.f32.xlu0 %v542
      %v558 = vpop.xlane.xlu0 %557
      %v559 = vsub.f32 %v516, %v544
      %v560 = vsub.f32 %v518, %v546
      %v561 = vsub.f32 %v521, %v548
      %v562 = vsub.f32 %v523, %v550
      %v563 = vsub.f32 %v526, %v552
      %v564 = vsub.f32 %v528, %v554
      %v565 = vsub.f32 %v531, %v556
      %v566 = vsub.f32 %v533, %v558
      %v567 = vmul.f32 %v559, 1.442695
      %v568 = vpow.pop %v567
      %v569 = vmul.f32 %v560, 1.442695
      %v570 = vpow.pop %v569
      %v571 = vmul.f32 %v561, 1.442695
      %v572 = vpow.pop %v571
      %v573 = vmul.f32 %v562, 1.442695
      %v574 = vpow.pop %v573
      %v575 = vmul.f32 %v563, 1.442695
      %v576 = vpow.pop %v575
      %v577 = vmul.f32 %v564, 1.442695
      %v578 = vpow.pop %v577
      %v579 = vmul.f32 %v565, 1.442695
      %v580 = vpow.pop %v579
      %v581 = vmul.f32 %v566, 1.442695
      %v582 = vpow.pop %v581
      %v583 = vsel %vm420, %v568, 0.0
      %v584 = vsel %vm420, %v570, 0.0
      %v585 = vsel %vm420, %v572, 0.0
      %v586 = vsel %vm420, %v574, 0.0
      %v587 = vsel %vm420, %v576, 0.0
      %v588 = vsel %vm420, %v578, 0.0
      %v589 = vsel %vm420, %v580, 0.0
      %v590 = vsel %vm420, %v582, 0.0
      %591 = vadd.xlane.f32.xlu0 %v583
      %v592 = vpop.xlane.xlu0 %591
      %593 = vadd.xlane.f32.xlu0 %v584
      %v594 = vpop.xlane.xlu0 %593
      %595 = vadd.xlane.f32.xlu0 %v585
      %v596 = vpop.xlane.xlu0 %595
      %597 = vadd.xlane.f32.xlu0 %v586
      %v598 = vpop.xlane.xlu0 %597
      %599 = vadd.xlane.f32.xlu0 %v587
      %v600 = vpop.xlane.xlu0 %599
      %601 = vadd.xlane.f32.xlu0 %v588
      %v602 = vpop.xlane.xlu0 %601
      %603 = vadd.xlane.f32.xlu0 %v589
      %v604 = vpop.xlane.xlu0 %603
      %605 = vadd.xlane.f32.xlu0 %v590
      %v606 = vpop.xlane.xlu0 %605
      %v607 = vmul.f32 %v516, %v583
      %v608 = vmul.f32 %v518, %v584
      %v609 = vmul.f32 %v521, %v585
      %v610 = vmul.f32 %v523, %v586
      %v611 = vmul.f32 %v526, %v587
      %v612 = vmul.f32 %v528, %v588
      %v613 = vmul.f32 %v531, %v589
      %v614 = vmul.f32 %v533, %v590
      %v615 = vrcp.pop %v592
      %v616 = vrcp.pop %v594
      %v617 = vrcp.pop %v596
      %v618 = vrcp.pop %v598
      %v619 = vrcp.pop %v600
      %v620 = vrcp.pop %v602
      %v621 = vrcp.pop %v604
      %v622 = vrcp.pop %v606
      %v623 = vmul.f32 %v607, %v615
      %v624 = vmul.f32 %v608, %v616
      %v625 = vmul.f32 %v609, %v617
      %v626 = vmul.f32 %v610, %v618
      %v627 = vmul.f32 %v611, %v619
      %v628 = vmul.f32 %v612, %v620
      %v629 = vmul.f32 %v613, %v621
      %v630 = vmul.f32 %v614, %v622
      %v631 = vpack.c.bf16 %v624, %v623
      %v632 = vpack.c.bf16 %v626, %v625
      %v633 = vpack.c.bf16 %v628, %v627
      %v634 = vpack.c.bf16 %v630, %v629
      %v635 = vld [vmem:[%s368] sm:$0xf]
      %v636 = vld [vmem:[%s368 + $0x4] sm:$0xf]
      %v637 = vld [vmem:[%s368 + $0x8] sm:$0xf]
      %v638 = vld [vmem:[%s368 + $0xc] sm:$0xf]
      %v639 = vld [vmem:[%s368 + $0x10] sm:$0xf]
      %v640 = vld [vmem:[%s368 + $0x14] sm:$0xf]
      %v641 = vld [vmem:[%s368 + $0x18] sm:$0xf]
      %v642 = vld [vmem:[%s368 + $0x1c] sm:$0xf]
      %v643 = vld [vmem:[%s368 + $0x20] sm:$0xf]
      %v644 = vld [vmem:[%s368 + $0x24] sm:$0xf]
      %v645 = vld [vmem:[%s368 + $0x28] sm:$0xf]
      %v646 = vld [vmem:[%s368 + $0x2c] sm:$0xf]
      %v647 = vld [vmem:[%s368 + $0x30] sm:$0xf]
      %v648 = vld [vmem:[%s368 + $0x34] sm:$0xf]
      %v649 = vld [vmem:[%s368 + $0x38] sm:$0xf]
      %v650 = vld [vmem:[%s368 + $0x3c] sm:$0xf]
      %v651 = vperm.slane %v417, 0
      %v668 = vunpack.c.l.b16 %v635
      %v669 = vunpack.c.l.b16 %v636
      %v670 = vunpack.c.l.b16 %v637
      %v671 = vunpack.c.l.b16 %v638
      %v672 = vunpack.c.l.b16 %v639
      %v673 = vunpack.c.l.b16 %v640
      %v674 = vunpack.c.l.b16 %v641
      %v675 = vunpack.c.l.b16 %v642
      %v676 = vunpack.c.l.b16 %v643
      %v677 = vunpack.c.l.b16 %v644
      %v678 = vunpack.c.l.b16 %v645
      %v679 = vunpack.c.l.b16 %v646
      %v680 = vunpack.c.l.b16 %v647
      %v681 = vunpack.c.l.b16 %v648
      %v682 = vunpack.c.l.b16 %v649
      %v683 = vunpack.c.l.b16 %v650
      %v684 = vpack.c.b16 %v669, %v668
      %v685 = vpack.c.b16 %v671, %v670
      %v686 = vpack.c.b16 %v673, %v672
      %v687 = vpack.c.b16 %v675, %v674
      %v688 = vpack.c.b16 %v677, %v676
      %v689 = vpack.c.b16 %v679, %v678
      %v690 = vpack.c.b16 %v681, %v680
      %v691 = vpack.c.b16 %v683, %v682
      %700 = vmatpush.bf16.msra.mxu0 %v691
      %701 = vmatpush.bf16.msra.mxu0 %v690
      %702 = vmatpush.bf16.msra.mxu0 %v689
      %703 = vmatpush.bf16.msra.mxu0 %v688
      %704 = vmatpush.bf16.msra.mxu0 %v687
      %705 = vmatpush.bf16.msra.mxu0 %v686
      %706 = vmatpush.bf16.msra.mxu0 %v685
      %707 = vmatpush.bf16.msra.mxu0 %v684
      %708 = vmatmul.bf16.gmra.mxu0 %v631
      %v709 = vpop.f32.mrf.mxu0
      %v710 = vadd.f32 %v651, %v709
      %v711 = vpop.f32.mrf.mxu0
      %v712 = vadd.f32 %v651, %v711
      %713 = vmatmul.bf16.gmra.mxu0 %v632
      %v714 = vpop.f32.mrf.mxu0
      %v715 = vadd.f32 %v651, %v714
      %v716 = vpop.f32.mrf.mxu0
      %v717 = vadd.f32 %v651, %v716
      %718 = vmatmul.bf16.gmra.mxu0 %v633
      %v719 = vpop.f32.mrf.mxu0
      %v720 = vadd.f32 %v651, %v719
      %v721 = vpop.f32.mrf.mxu0
      %v722 = vadd.f32 %v651, %v721
      %723 = vmatmul.bf16.gmra.mxu0 %v634
      %v724 = vpop.f32.mrf.mxu0
      %v725 = vadd.f32 %v651, %v724
      %v726 = vpop.f32.mrf.mxu0
      %v727 = vadd.f32 %v651, %v726
      %728 = vdwg.mxu0
      %v729 = vmax.f32 %v710, 0.0
      %v730 = vmax.f32 %v712, 0.0
      %v731 = vmax.f32 %v715, 0.0
      %v732 = vmax.f32 %v717, 0.0
      %v733 = vmax.f32 %v720, 0.0
      %v734 = vmax.f32 %v722, 0.0
      %v735 = vmax.f32 %v725, 0.0
      %v736 = vmax.f32 %v727, 0.0
      %v737 = vpack.c.bf16 %v730, %v729
      %v738 = vpack.c.bf16 %v732, %v731
      %v739 = vpack.c.bf16 %v734, %v733
      %v740 = vpack.c.bf16 %v736, %v735
      %v741 = vld [vmem:[%s373] sm:$0xf]
      %v742 = vld [vmem:[%s373 + $0x4] sm:$0xf]
      %v743 = vld [vmem:[%s373 + $0x8] sm:$0xf]
      %v744 = vld [vmem:[%s373 + $0xc] sm:$0xf]
      %v745 = vld [vmem:[%s373 + $0x10] sm:$0xf]
      %v746 = vld [vmem:[%s373 + $0x14] sm:$0xf]
      %v747 = vld [vmem:[%s373 + $0x18] sm:$0xf]
      %v748 = vld [vmem:[%s373 + $0x1c] sm:$0xf]
      %v749 = vld [vmem:[%s373 + $0x20] sm:$0xf]
      %v750 = vld [vmem:[%s373 + $0x24] sm:$0xf]
      %v751 = vld [vmem:[%s373 + $0x28] sm:$0xf]
      %v752 = vld [vmem:[%s373 + $0x2c] sm:$0xf]
      %v753 = vld [vmem:[%s373 + $0x30] sm:$0xf]
      %v754 = vld [vmem:[%s373 + $0x34] sm:$0xf]
      %v755 = vld [vmem:[%s373 + $0x38] sm:$0xf]
      %v756 = vld [vmem:[%s373 + $0x3c] sm:$0xf]
      %v757 = vperm.slane %v417, 1
      %v774 = vunpack.c.l.b16 %v741
      %v775 = vunpack.c.l.b16 %v742
      %v776 = vunpack.c.l.b16 %v743
      %v777 = vunpack.c.l.b16 %v744
      %v778 = vunpack.c.l.b16 %v745
      %v779 = vunpack.c.l.b16 %v746
      %v780 = vunpack.c.l.b16 %v747
      %v781 = vunpack.c.l.b16 %v748
      %v782 = vunpack.c.l.b16 %v749
      %v783 = vunpack.c.l.b16 %v750
      %v784 = vunpack.c.l.b16 %v751
      %v785 = vunpack.c.l.b16 %v752
      %v786 = vunpack.c.l.b16 %v753
      %v787 = vunpack.c.l.b16 %v754
      %v788 = vunpack.c.l.b16 %v755
      %v789 = vunpack.c.l.b16 %v756
      %v790 = vpack.c.b16 %v775, %v774
      %v791 = vpack.c.b16 %v777, %v776
      %v792 = vpack.c.b16 %v779, %v778
      %v793 = vpack.c.b16 %v781, %v780
      %v794 = vpack.c.b16 %v783, %v782
      %v795 = vpack.c.b16 %v785, %v784
      %v796 = vpack.c.b16 %v787, %v786
      %v797 = vpack.c.b16 %v789, %v788
      %806 = vmatpush.bf16.msra.mxu0 %v797
      %807 = vmatpush.bf16.msra.mxu0 %v796
      %808 = vmatpush.bf16.msra.mxu0 %v795
      %809 = vmatpush.bf16.msra.mxu0 %v794
      %810 = vmatpush.bf16.msra.mxu0 %v793
      %811 = vmatpush.bf16.msra.mxu0 %v792
      %812 = vmatpush.bf16.msra.mxu0 %v791
      %813 = vmatpush.bf16.msra.mxu0 %v790
      %814 = vmatmul.bf16.gmra.mxu0 %v737
      %v815 = vpop.f32.mrf.mxu0
      %v816 = vadd.f32 %v757, %v815
      %v817 = vpop.f32.mrf.mxu0
      %v818 = vadd.f32 %v757, %v817
      %819 = vmatmul.bf16.gmra.mxu0 %v738
      %v820 = vpop.f32.mrf.mxu0
      %v821 = vadd.f32 %v757, %v820
      %v822 = vpop.f32.mrf.mxu0
      %v823 = vadd.f32 %v757, %v822
      %824 = vmatmul.bf16.gmra.mxu0 %v739
      %v825 = vpop.f32.mrf.mxu0
      %v826 = vadd.f32 %v757, %v825
      %v827 = vpop.f32.mrf.mxu0
      %v828 = vadd.f32 %v757, %v827
      %829 = vmatmul.bf16.gmra.mxu0 %v740
      %v830 = vpop.f32.mrf.mxu0
      %v831 = vadd.f32 %v757, %v830
      %v832 = vpop.f32.mrf.mxu0
      %v833 = vadd.f32 %v757, %v832
      %834 = vdwg.mxu0
      %v835 = vld [vmem:[%s378] sm:$0xf]
      %v836 = vld [vmem:[%s378 + $0x4] sm:$0xf]
      %v837 = vperm.slane %v417, 2
      %v840 = vunpack.c.l.b16 %v835
      %v841 = vunpack.c.l.b16 %v836
      %v842 = vpack.c.b16 %v841, %v840
      %vm844 = vcmask 130048
      %v846 = vsel %vm844, 0, 0
      %848 = vmatpush.bf16.msra.mxu0 0
      %849 = vmatpush.bf16.msra.mxu0 0
      %850 = vmatpush.bf16.msra.mxu0 0
      %851 = vmatpush.bf16.msra.mxu0 0
      %852 = vmatpush.bf16.msra.mxu0 0
      %853 = vmatpush.bf16.msra.mxu0 0
      %854 = vmatpush.bf16.msra.mxu0 0
      %855 = vmatpush.bf16.msra.mxu0 %v842
      %856 = vmatmul.bf16.gmra.mxu0 %v846
      %v857 = vpop.f32.mrf.mxu0
      %v858 = vadd.f32 %v837, %v857
      %v859 = vpop.f32.mrf.mxu0
      %860 = vdwg.mxu0
      %v861 = vadd.f32 %v816, %v858
      %v862 = vxor.u32 %v861, 2147483648
      %v863 = vmul.f32 %v862, 1.442695
      %v864 = vpow.pop %v863
      %v865 = vadd.f32 %v864, 1.0
      %v866 = vrcp.pop %v865
      %v867 = vmul.f32 %v865, %v866
      %v868 = vsub.f32 1.0, %v867
      %v869 = vmul.f32 %v866, %v868
      %v870 = vadd.f32 %v866, %v869
      %vm871 = vweird.f32 %v865
      %vm872 = vweird.f32 %v866
      %vm873 = vmor %vm871, %vm872
      %v874 = vsel %vm873, %v866, %v870
      %v875 = vand.u32 2147483647, %v865
      %vm876 = vcmp.eq.f32.partialorder %v875, 8.507059e+37
      %v877 = vand.u32 %v865, 2147483648
      %v878 = vor.u32 1.1754944e-38, %v877
      %v879 = vsel %vm876, %v878, %v874
      %v880 = vmul.f32 1.0, %v879
      %882 = vrot.lane.b32.xlu0 %v858, 96
      %v883 = vpop.permute.xlu0 %882
      %v885 = vmul.f32 %v880, %v883
      %887 = vrot.lane.b32.xlu0 %v885, 32
      %v888 = vpop.permute.xlu0 %887
      %v890 = vadd.f32 %v816, %v888
      %v891 = vtanh.pop %v890
      %v892 = vsub.f32 0.0, %v891
      %894 = vrot.lane.b32.xlu0 %v892, 112
      %v895 = vpop.permute.xlu0 %894
      %v897 = vmul.f32 %v880, %v895
      %899 = vrot.lane.b32.xlu0 %v897, 16
      %v900 = vpop.permute.xlu0 %899
      %v902 = vadd.f32 %v891, %v900
      %v903 = vpack.c.bf16 %v902, %v902
      %905 = vrot.lane.b32.xlu0 %v903, 96
      %v906 = vpop.permute.xlu0 %905
      %v908 = vsel %vm844, %v906, 0
      %910 = vmatpush.bf16.msra.mxu0 0
      %911 = vmatpush.bf16.msra.mxu0 0
      %912 = vmatpush.bf16.msra.mxu0 0
      %913 = vmatpush.bf16.msra.mxu0 0
      %914 = vmatpush.bf16.msra.mxu0 0
      %915 = vmatpush.bf16.msra.mxu0 0
      %916 = vmatpush.bf16.msra.mxu0 0
      %917 = vmatpush.bf16.msra.mxu0 %v842
      %918 = vmatmul.bf16.gmra.mxu0 %v908
      %v919 = vpop.f32.mrf.mxu0
      %v920 = vadd.f32 %v837, %v919
      %v921 = vpop.f32.mrf.mxu0
      %922 = vdwg.mxu0
      %v923 = vadd.f32 %v818, %v920
      %v924 = vxor.u32 %v923, 2147483648
      %v925 = vmul.f32 %v924, 1.442695
      %v926 = vpow.pop %v925
      %v927 = vadd.f32 %v926, 1.0
      %v928 = vrcp.pop %v927
      %v929 = vmul.f32 %v927, %v928
      %v930 = vsub.f32 1.0, %v929
      %v931 = vmul.f32 %v928, %v930
      %v932 = vadd.f32 %v928, %v931
      %vm933 = vweird.f32 %v927
      %vm934 = vweird.f32 %v928
      %vm935 = vmor %vm933, %vm934
      %v936 = vsel %vm935, %v928, %v932
      %v937 = vand.u32 2147483647, %v927
      %vm938 = vcmp.eq.f32.partialorder %v937, 8.507059e+37
      %v939 = vand.u32 %v927, 2147483648
      %v940 = vor.u32 1.1754944e-38, %v939
      %v941 = vsel %vm938, %v940, %v936
      %v942 = vmul.f32 1.0, %v941
      %944 = vrot.lane.b32.xlu0 %v920, 96
      %v945 = vpop.permute.xlu0 %944
      %v947 = vmul.f32 %v942, %v945
      %949 = vrot.lane.b32.xlu0 %v947, 32
      %v950 = vpop.permute.xlu0 %949
      %v952 = vadd.f32 %v818, %v950
      %v953 = vtanh.pop %v952
      %v954 = vsub.f32 %v902, %v953
      %956 = vrot.lane.b32.xlu0 %v954, 112
      %v957 = vpop.permute.xlu0 %956
      %v959 = vmul.f32 %v942, %v957
      %961 = vrot.lane.b32.xlu0 %v959, 16
      %v962 = vpop.permute.xlu0 %961
      %v964 = vadd.f32 %v953, %v962
      %v965 = vpack.c.bf16 %v964, %v964
      %967 = vrot.lane.b32.xlu0 %v965, 96
      %v968 = vpop.permute.xlu0 %967
      %v970 = vsel %vm844, %v968, 0
      %972 = vmatpush.bf16.msra.mxu0 0
      %973 = vmatpush.bf16.msra.mxu0 0
      %974 = vmatpush.bf16.msra.mxu0 0
      %975 = vmatpush.bf16.msra.mxu0 0
      %976 = vmatpush.bf16.msra.mxu0 0
      %977 = vmatpush.bf16.msra.mxu0 0
      %978 = vmatpush.bf16.msra.mxu0 0
      %979 = vmatpush.bf16.msra.mxu0 %v842
      %980 = vmatmul.bf16.gmra.mxu0 %v970
      %v981 = vpop.f32.mrf.mxu0
      %v982 = vadd.f32 %v837, %v981
      %v983 = vpop.f32.mrf.mxu0
      %984 = vdwg.mxu0
      %v985 = vadd.f32 %v821, %v982
      %v986 = vxor.u32 %v985, 2147483648
      %v987 = vmul.f32 %v986, 1.442695
      %v988 = vpow.pop %v987
      %v989 = vadd.f32 %v988, 1.0
      %v990 = vrcp.pop %v989
      %v991 = vmul.f32 %v989, %v990
      %v992 = vsub.f32 1.0, %v991
      %v993 = vmul.f32 %v990, %v992
      %v994 = vadd.f32 %v990, %v993
      %vm995 = vweird.f32 %v989
      %vm996 = vweird.f32 %v990
      %vm997 = vmor %vm995, %vm996
      %v998 = vsel %vm997, %v990, %v994
      %v999 = vand.u32 2147483647, %v989
      %vm1000 = vcmp.eq.f32.partialorder %v999, 8.507059e+37
      %v1001 = vand.u32 %v989, 2147483648
      %v1002 = vor.u32 1.1754944e-38, %v1001
      %v1003 = vsel %vm1000, %v1002, %v998
      %v1004 = vmul.f32 1.0, %v1003
      %1006 = vrot.lane.b32.xlu0 %v982, 96
      %v1007 = vpop.permute.xlu0 %1006
      %v1009 = vmul.f32 %v1004, %v1007
      %1011 = vrot.lane.b32.xlu0 %v1009, 32
      %v1012 = vpop.permute.xlu0 %1011
      %v1014 = vadd.f32 %v821, %v1012
      %v1015 = vtanh.pop %v1014
      %v1016 = vsub.f32 %v964, %v1015
      %1018 = vrot.lane.b32.xlu0 %v1016, 112
      %v1019 = vpop.permute.xlu0 %1018
      %v1021 = vmul.f32 %v1004, %v1019
      %1023 = vrot.lane.b32.xlu0 %v1021, 16
      %v1024 = vpop.permute.xlu0 %1023
      %v1026 = vadd.f32 %v1015, %v1024
      %v1027 = vpack.c.bf16 %v1026, %v1026
      %1029 = vrot.lane.b32.xlu0 %v1027, 96
      %v1030 = vpop.permute.xlu0 %1029
      %v1032 = vsel %vm844, %v1030, 0
      %1034 = vmatpush.bf16.msra.mxu0 0
      %1035 = vmatpush.bf16.msra.mxu0 0
      %1036 = vmatpush.bf16.msra.mxu0 0
      %1037 = vmatpush.bf16.msra.mxu0 0
      %1038 = vmatpush.bf16.msra.mxu0 0
      %1039 = vmatpush.bf16.msra.mxu0 0
      %1040 = vmatpush.bf16.msra.mxu0 0
      %1041 = vmatpush.bf16.msra.mxu0 %v842
      %1042 = vmatmul.bf16.gmra.mxu0 %v1032
      %v1043 = vpop.f32.mrf.mxu0
      %v1044 = vadd.f32 %v837, %v1043
      %v1045 = vpop.f32.mrf.mxu0
      %1046 = vdwg.mxu0
      %v1047 = vadd.f32 %v823, %v1044
      %v1048 = vxor.u32 %v1047, 2147483648
      %v1049 = vmul.f32 %v1048, 1.442695
      %v1050 = vpow.pop %v1049
      %v1051 = vadd.f32 %v1050, 1.0
      %v1052 = vrcp.pop %v1051
      %v1053 = vmul.f32 %v1051, %v1052
      %v1054 = vsub.f32 1.0, %v1053
      %v1055 = vmul.f32 %v1052, %v1054
      %v1056 = vadd.f32 %v1052, %v1055
      %vm1057 = vweird.f32 %v1051
      %vm1058 = vweird.f32 %v1052
      %vm1059 = vmor %vm1057, %vm1058
      %v1060 = vsel %vm1059, %v1052, %v1056
      %v1061 = vand.u32 2147483647, %v1051
      %vm1062 = vcmp.eq.f32.partialorder %v1061, 8.507059e+37
      %v1063 = vand.u32 %v1051, 2147483648
      %v1064 = vor.u32 1.1754944e-38, %v1063
      %v1065 = vsel %vm1062, %v1064, %v1060
      %v1066 = vmul.f32 1.0, %v1065
      %1068 = vrot.lane.b32.xlu0 %v1044, 96
      %v1069 = vpop.permute.xlu0 %1068
      %v1071 = vmul.f32 %v1066, %v1069
      %1073 = vrot.lane.b32.xlu0 %v1071, 32
      %v1074 = vpop.permute.xlu0 %1073
      %v1076 = vadd.f32 %v823, %v1074
      %v1077 = vtanh.pop %v1076
      %v1078 = vsub.f32 %v1026, %v1077
      %1080 = vrot.lane.b32.xlu0 %v1078, 112
      %v1081 = vpop.permute.xlu0 %1080
      %v1083 = vmul.f32 %v1066, %v1081
      %1085 = vrot.lane.b32.xlu0 %v1083, 16
      %v1086 = vpop.permute.xlu0 %1085
      %v1088 = vadd.f32 %v1077, %v1086
      %v1089 = vpack.c.bf16 %v1088, %v1088
      %1091 = vrot.lane.b32.xlu0 %v1089, 96
      %v1092 = vpop.permute.xlu0 %1091
      %v1094 = vsel %vm844, %v1092, 0
      %1096 = vmatpush.bf16.msra.mxu0 0
      %1097 = vmatpush.bf16.msra.mxu0 0
      %1098 = vmatpush.bf16.msra.mxu0 0
      %1099 = vmatpush.bf16.msra.mxu0 0
      %1100 = vmatpush.bf16.msra.mxu0 0
      %1101 = vmatpush.bf16.msra.mxu0 0
      %1102 = vmatpush.bf16.msra.mxu0 0
      %1103 = vmatpush.bf16.msra.mxu0 %v842
      %1104 = vmatmul.bf16.gmra.mxu0 %v1094
      %v1105 = vpop.f32.mrf.mxu0
      %v1106 = vadd.f32 %v837, %v1105
      %v1107 = vpop.f32.mrf.mxu0
      %1108 = vdwg.mxu0
      %v1109 = vadd.f32 %v826, %v1106
      %v1110 = vxor.u32 %v1109, 2147483648
      %v1111 = vmul.f32 %v1110, 1.442695
      %v1112 = vpow.pop %v1111
      %v1113 = vadd.f32 %v1112, 1.0
      %v1114 = vrcp.pop %v1113
      %v1115 = vmul.f32 %v1113, %v1114
      %v1116 = vsub.f32 1.0, %v1115
      %v1117 = vmul.f32 %v1114, %v1116
      %v1118 = vadd.f32 %v1114, %v1117
      %vm1119 = vweird.f32 %v1113
      %vm1120 = vweird.f32 %v1114
      %vm1121 = vmor %vm1119, %vm1120
      %v1122 = vsel %vm1121, %v1114, %v1118
      %v1123 = vand.u32 2147483647, %v1113
      %vm1124 = vcmp.eq.f32.partialorder %v1123, 8.507059e+37
      %v1125 = vand.u32 %v1113, 2147483648
      %v1126 = vor.u32 1.1754944e-38, %v1125
      %v1127 = vsel %vm1124, %v1126, %v1122
      %v1128 = vmul.f32 1.0, %v1127
      %1130 = vrot.lane.b32.xlu0 %v1106, 96
      %v1131 = vpop.permute.xlu0 %1130
      %v1133 = vmul.f32 %v1128, %v1131
      %1135 = vrot.lane.b32.xlu0 %v1133, 32
      %v1136 = vpop.permute.xlu0 %1135
      %v1138 = vadd.f32 %v826, %v1136
      %v1139 = vtanh.pop %v1138
      %v1140 = vsub.f32 %v1088, %v1139
      %1142 = vrot.lane.b32.xlu0 %v1140, 112
      %v1143 = vpop.permute.xlu0 %1142
      %v1145 = vmul.f32 %v1128, %v1143
      %1147 = vrot.lane.b32.xlu0 %v1145, 16
      %v1148 = vpop.permute.xlu0 %1147
      %v1150 = vadd.f32 %v1139, %v1148
      %v1151 = vpack.c.bf16 %v1150, %v1150
      %1153 = vrot.lane.b32.xlu0 %v1151, 96
      %v1154 = vpop.permute.xlu0 %1153
      %v1156 = vsel %vm844, %v1154, 0
      %1158 = vmatpush.bf16.msra.mxu0 0
      %1159 = vmatpush.bf16.msra.mxu0 0
      %1160 = vmatpush.bf16.msra.mxu0 0
      %1161 = vmatpush.bf16.msra.mxu0 0
      %1162 = vmatpush.bf16.msra.mxu0 0
      %1163 = vmatpush.bf16.msra.mxu0 0
      %1164 = vmatpush.bf16.msra.mxu0 0
      %1165 = vmatpush.bf16.msra.mxu0 %v842
      %1166 = vmatmul.bf16.gmra.mxu0 %v1156
      %v1167 = vpop.f32.mrf.mxu0
      %v1168 = vadd.f32 %v837, %v1167
      %v1169 = vpop.f32.mrf.mxu0
      %1170 = vdwg.mxu0
      %v1171 = vadd.f32 %v828, %v1168
      %v1172 = vxor.u32 %v1171, 2147483648
      %v1173 = vmul.f32 %v1172, 1.442695
      %v1174 = vpow.pop %v1173
      %v1175 = vadd.f32 %v1174, 1.0
      %v1176 = vrcp.pop %v1175
      %v1177 = vmul.f32 %v1175, %v1176
      %v1178 = vsub.f32 1.0, %v1177
      %v1179 = vmul.f32 %v1176, %v1178
      %v1180 = vadd.f32 %v1176, %v1179
      %vm1181 = vweird.f32 %v1175
      %vm1182 = vweird.f32 %v1176
      %vm1183 = vmor %vm1181, %vm1182
      %v1184 = vsel %vm1183, %v1176, %v1180
      %v1185 = vand.u32 2147483647, %v1175
      %vm1186 = vcmp.eq.f32.partialorder %v1185, 8.507059e+37
      %v1187 = vand.u32 %v1175, 2147483648
      %v1188 = vor.u32 1.1754944e-38, %v1187
      %v1189 = vsel %vm1186, %v1188, %v1184
      %v1190 = vmul.f32 1.0, %v1189
      %1192 = vrot.lane.b32.xlu0 %v1168, 96
      %v1193 = vpop.permute.xlu0 %1192
      %v1195 = vmul.f32 %v1190, %v1193
      %1197 = vrot.lane.b32.xlu0 %v1195, 32
      %v1198 = vpop.permute.xlu0 %1197
      %v1200 = vadd.f32 %v828, %v1198
      %v1201 = vtanh.pop %v1200
      %v1202 = vsub.f32 %v1150, %v1201
      %1204 = vrot.lane.b32.xlu0 %v1202, 112
      %v1205 = vpop.permute.xlu0 %1204
      %v1207 = vmul.f32 %v1190, %v1205
      %1209 = vrot.lane.b32.xlu0 %v1207, 16
      %v1210 = vpop.permute.xlu0 %1209
      %v1212 = vadd.f32 %v1201, %v1210
      %v1213 = vpack.c.bf16 %v1212, %v1212
      %1215 = vrot.lane.b32.xlu0 %v1213, 96
      %v1216 = vpop.permute.xlu0 %1215
      %v1218 = vsel %vm844, %v1216, 0
      %1220 = vmatpush.bf16.msra.mxu0 0
      %1221 = vmatpush.bf16.msra.mxu0 0
      %1222 = vmatpush.bf16.msra.mxu0 0
      %1223 = vmatpush.bf16.msra.mxu0 0
      %1224 = vmatpush.bf16.msra.mxu0 0
      %1225 = vmatpush.bf16.msra.mxu0 0
      %1226 = vmatpush.bf16.msra.mxu0 0
      %1227 = vmatpush.bf16.msra.mxu0 %v842
      %1228 = vmatmul.bf16.gmra.mxu0 %v1218
      %v1229 = vpop.f32.mrf.mxu0
      %v1230 = vadd.f32 %v837, %v1229
      %v1231 = vpop.f32.mrf.mxu0
      %1232 = vdwg.mxu0
      %v1233 = vadd.f32 %v831, %v1230
      %v1234 = vxor.u32 %v1233, 2147483648
      %v1235 = vmul.f32 %v1234, 1.442695
      %v1236 = vpow.pop %v1235
      %v1237 = vadd.f32 %v1236, 1.0
      %v1238 = vrcp.pop %v1237
      %v1239 = vmul.f32 %v1237, %v1238
      %v1240 = vsub.f32 1.0, %v1239
      %v1241 = vmul.f32 %v1238, %v1240
      %v1242 = vadd.f32 %v1238, %v1241
      %vm1243 = vweird.f32 %v1237
      %vm1244 = vweird.f32 %v1238
      %vm1245 = vmor %vm1243, %vm1244
      %v1246 = vsel %vm1245, %v1238, %v1242
      %v1247 = vand.u32 2147483647, %v1237
      %vm1248 = vcmp.eq.f32.partialorder %v1247, 8.507059e+37
      %v1249 = vand.u32 %v1237, 2147483648
      %v1250 = vor.u32 1.1754944e-38, %v1249
      %v1251 = vsel %vm1248, %v1250, %v1246
      %v1252 = vmul.f32 1.0, %v1251
      %1254 = vrot.lane.b32.xlu0 %v1230, 96
      %v1255 = vpop.permute.xlu0 %1254
      %v1257 = vmul.f32 %v1252, %v1255
      %1259 = vrot.lane.b32.xlu0 %v1257, 32
      %v1260 = vpop.permute.xlu0 %1259
      %v1262 = vadd.f32 %v831, %v1260
      %v1263 = vtanh.pop %v1262
      %v1264 = vsub.f32 %v1212, %v1263
      %1266 = vrot.lane.b32.xlu0 %v1264, 112
      %v1267 = vpop.permute.xlu0 %1266
      %v1269 = vmul.f32 %v1252, %v1267
      %1271 = vrot.lane.b32.xlu0 %v1269, 16
      %v1272 = vpop.permute.xlu0 %1271
      %v1274 = vadd.f32 %v1263, %v1272
      %v1275 = vpack.c.bf16 %v1274, %v1274
      %1277 = vrot.lane.b32.xlu0 %v1275, 96
      %v1278 = vpop.permute.xlu0 %1277
      %v1280 = vsel %vm844, %v1278, 0
      %1282 = vmatpush.bf16.msra.mxu0 0
      %1283 = vmatpush.bf16.msra.mxu0 0
      %1284 = vmatpush.bf16.msra.mxu0 0
      %1285 = vmatpush.bf16.msra.mxu0 0
      %1286 = vmatpush.bf16.msra.mxu0 0
      %1287 = vmatpush.bf16.msra.mxu0 0
      %1288 = vmatpush.bf16.msra.mxu0 0
      %1289 = vmatpush.bf16.msra.mxu0 %v842
      %1290 = vmatmul.bf16.gmra.mxu0 %v1280
      %v1291 = vpop.f32.mrf.mxu0
      %v1292 = vadd.f32 %v837, %v1291
      %v1293 = vpop.f32.mrf.mxu0
      %1294 = vdwg.mxu0
      %v1295 = vadd.f32 %v833, %v1292
      %v1296 = vxor.u32 %v1295, 2147483648
      %v1297 = vmul.f32 %v1296, 1.442695
      %v1298 = vpow.pop %v1297
      %v1299 = vadd.f32 %v1298, 1.0
      %v1300 = vrcp.pop %v1299
      %v1301 = vmul.f32 %v1299, %v1300
      %v1302 = vsub.f32 1.0, %v1301
      %v1303 = vmul.f32 %v1300, %v1302
      %v1304 = vadd.f32 %v1300, %v1303
      %vm1305 = vweird.f32 %v1299
      %vm1306 = vweird.f32 %v1300
      %vm1307 = vmor %vm1305, %vm1306
      %v1308 = vsel %vm1307, %v1300, %v1304
      %v1309 = vand.u32 2147483647, %v1299
      %vm1310 = vcmp.eq.f32.partialorder %v1309, 8.507059e+37
      %v1311 = vand.u32 %v1299, 2147483648
      %v1312 = vor.u32 1.1754944e-38, %v1311
      %v1313 = vsel %vm1310, %v1312, %v1308
      %v1314 = vmul.f32 1.0, %v1313
      %1316 = vrot.lane.b32.xlu0 %v1292, 96
      %v1317 = vpop.permute.xlu0 %1316
      %v1319 = vmul.f32 %v1314, %v1317
      %1321 = vrot.lane.b32.xlu0 %v1319, 32
      %v1322 = vpop.permute.xlu0 %1321
      %v1324 = vadd.f32 %v833, %v1322
      %v1325 = vtanh.pop %v1324
      %v1326 = vsub.f32 %v1274, %v1325
      %1328 = vrot.lane.b32.xlu0 %v1326, 112
      %v1329 = vpop.permute.xlu0 %1328
      %v1331 = vmul.f32 %v1314, %v1329
      %1333 = vrot.lane.b32.xlu0 %v1331, 16
      %v1334 = vpop.permute.xlu0 %1333
      %v1336 = vadd.f32 %v1325, %v1334
      %v1337 = vpack.c.bf16 %v964, %v902
      %v1338 = vpack.c.bf16 %v1088, %v1026
      %v1339 = vpack.c.bf16 %v1212, %v1150
      %v1340 = vpack.c.bf16 %v1336, %v1274
      %v1341 = vld [vmem:[%s383] sm:$0xf]
      %v1342 = vld [vmem:[%s383 + $0x4] sm:$0xf]
      %v1343 = vperm.slane %v417, 3
      %1348 = vrot.lane.b32.xlu0 %v1337, 96
      %v1349 = vpop.permute.xlu0 %1348
      %1350 = vrot.lane.b32.xlu0 %v1338, 96
      %v1351 = vpop.permute.xlu0 %1350
      %1352 = vrot.lane.b32.xlu0 %v1339, 96
      %v1353 = vpop.permute.xlu0 %1352
      %1354 = vrot.lane.b32.xlu0 %v1340, 96
      %v1355 = vpop.permute.xlu0 %1354
      %v1358 = vunpack.c.l.b16 %v1341
      %v1359 = vunpack.c.l.b16 %v1342
      %v1360 = vpack.c.b16 %v1359, %v1358
      %v1363 = vsel %vm844, %v1349, 0
      %v1366 = vsel %vm844, %v1351, 0
      %v1369 = vsel %vm844, %v1353, 0
      %v1372 = vsel %vm844, %v1355, 0
      %1374 = vmatpush.bf16.msra.mxu0 0
      %1375 = vmatpush.bf16.msra.mxu0 0
      %1376 = vmatpush.bf16.msra.mxu0 0
      %1377 = vmatpush.bf16.msra.mxu0 0
      %1378 = vmatpush.bf16.msra.mxu0 0
      %1379 = vmatpush.bf16.msra.mxu0 0
      %1380 = vmatpush.bf16.msra.mxu0 0
      %1381 = vmatpush.bf16.msra.mxu0 %v1360
      %1382 = vmatmul.bf16.gmra.mxu0 %v1363
      %v1383 = vpop.f32.mrf.mxu0
      %v1384 = vadd.f32 %v1343, %v1383
      %v1385 = vpop.f32.mrf.mxu0
      %v1386 = vadd.f32 %v1343, %v1385
      %1387 = vmatmul.bf16.gmra.mxu0 %v1366
      %v1388 = vpop.f32.mrf.mxu0
      %v1389 = vadd.f32 %v1343, %v1388
      %v1390 = vpop.f32.mrf.mxu0
      %v1391 = vadd.f32 %v1343, %v1390
      %1392 = vmatmul.bf16.gmra.mxu0 %v1369
      %v1393 = vpop.f32.mrf.mxu0
      %v1394 = vadd.f32 %v1343, %v1393
      %v1395 = vpop.f32.mrf.mxu0
      %v1396 = vadd.f32 %v1343, %v1395
      %1397 = vmatmul.bf16.gmra.mxu0 %v1372
      %v1398 = vpop.f32.mrf.mxu0
      %v1399 = vadd.f32 %v1343, %v1398
      %v1400 = vpop.f32.mrf.mxu0
      %v1401 = vadd.f32 %v1343, %v1400
      %1402 = vdwg.mxu0
      %v1403 = vsel %vm421, %v1384, %v729
      %v1404 = vsel %vm421, %v1386, %v730
      %v1405 = vsel %vm421, %v1389, %v731
      %v1406 = vsel %vm421, %v1391, %v732
      %v1407 = vsel %vm421, %v1394, %v733
      %v1408 = vsel %vm421, %v1396, %v734
      %v1409 = vsel %vm421, %v1399, %v735
      %v1410 = vsel %vm421, %v1401, %v736
      // Predicated region
      $region57: #{gcn_layer.1} parent=51 // pred_check
        %p1411 = pneg %p389
      $region58: #{gcn_layer.1} parent=51 // pred_check_branch
        %1413 = sbr.rel (%p1411) target = $region60
      $region59: #{gcn_layer.1} parent=51 // pred_region
        %1414 = vst [vmem:[#allocation2] sm:$0xff] %v1403
        %1415 = vst [vmem:[#allocation2 + $0x8] sm:$0xff] %v1404
        %1416 = vst [vmem:[#allocation2 + $0x10] sm:$0xff] %v1405
        %1417 = vst [vmem:[#allocation2 + $0x18] sm:$0xff] %v1406
        %1418 = vst [vmem:[#allocation2 + $0x20] sm:$0xff] %v1407
        %1419 = vst [vmem:[#allocation2 + $0x28] sm:$0xff] %v1408
        %1420 = vst [vmem:[#allocation2 + $0x30] sm:$0xff] %v1409
        %1421 = vst [vmem:[#allocation2 + $0x38] sm:$0xff] %v1410
      $region60: #{gcn_layer.1} parent=51 // pred_fallthru
        _
      %1422 = vst [vmem:[#allocation3] sm:$0xff] %v1403
      %1423 = vst [vmem:[#allocation3 + $0x8] sm:$0xff] %v1404
      %1424 = vst [vmem:[#allocation3 + $0x10] sm:$0xff] %v1405
      %1425 = vst [vmem:[#allocation3 + $0x18] sm:$0xff] %v1406
      %1426 = vst [vmem:[#allocation3 + $0x20] sm:$0xff] %v1407
      %1427 = vst [vmem:[#allocation3 + $0x28] sm:$0xff] %v1408
      %1428 = vst [vmem:[#allocation3 + $0x30] sm:$0xff] %v1409
      %1429 = vst [vmem:[#allocation3 + $0x38] sm:$0xff] %v1410
      %p1430 = scmp.eq.s32.totalorder %s19, 2
      // Predicated region
      $region61: #{gcn_layer.1} parent=51 // pred_check
        %p1431 = pneg %p1430
      $region62: #{gcn_layer.1} parent=51 // pred_check_branch
        %1433 = sbr.rel (%p1431) target = $region64
      $region63: #{gcn_layer.1} parent=51 // pred_region
        %v1434 = vld [vmem:[#allocation2] sm:$0xff]
        %v1435 = vld [vmem:[#allocation2 + $0x8] sm:$0xff]
        %v1436 = vld [vmem:[#allocation2 + $0x10] sm:$0xff]
        %v1437 = vld [vmem:[#allocation2 + $0x18] sm:$0xff]
        %v1438 = vld [vmem:[#allocation2 + $0x20] sm:$0xff]
        %v1439 = vld [vmem:[#allocation2 + $0x28] sm:$0xff]
        %v1440 = vld [vmem:[#allocation2 + $0x30] sm:$0xff]
        %v1441 = vld [vmem:[#allocation2 + $0x38] sm:$0xff]
        %v1442 = vadd.f32 %v1434, %v1403
        %v1443 = vadd.f32 %v1435, %v1404
        %v1444 = vadd.f32 %v1436, %v1405
        %v1445 = vadd.f32 %v1437, %v1406
        %v1446 = vadd.f32 %v1438, %v1407
        %v1447 = vadd.f32 %v1439, %v1408
        %v1448 = vadd.f32 %v1440, %v1409
        %v1449 = vadd.f32 %v1441, %v1410
        %1450 = vst [vmem:[%s8] sm:$0xff] %v1442
        %1451 = vst [vmem:[%s8 + $0x8] sm:$0xff] %v1443
        %1452 = vst [vmem:[%s8 + $0x10] sm:$0xff] %v1444
        %1453 = vst [vmem:[%s8 + $0x18] sm:$0xff] %v1445
        %1454 = vst [vmem:[%s8 + $0x20] sm:$0xff] %v1446
        %1455 = vst [vmem:[%s8 + $0x28] sm:$0xff] %v1447
        %1456 = vst [vmem:[%s8 + $0x30] sm:$0xff] %v1448
        %1457 = vst [vmem:[%s8 + $0x38] sm:$0xff] %v1449
      $region64: #{gcn_layer.1} parent=51 // pred_fallthru
        _
      // Predicated region
      $region65: #{gcn_layer.1} parent=51 // pred_check
        %p1458 = pneg %p230
      $region66: #{gcn_layer.1} parent=51 // pred_check_branch
        %1460 = sbr.rel (%p1458) target = $region68
      $region67: #{gcn_layer.1} parent=51 // pred_region
        _
      $region68: #{gcn_layer.1} parent=51 // pred_fallthru
        _
      // Predicated region
      $region69: #{gcn_layer.1} parent=51 // pred_check
        %p1461 = pneg %p230
      $region70: #{gcn_layer.1} parent=51 // pred_check_branch
        %1463 = sbr.rel (%p1461) target = $region72
      $region71: #{gcn_layer.1} parent=51 // pred_region
        _
      $region72: #{gcn_layer.1} parent=51 // pred_fallthru
        _
    $region52: #{gcn_layer.1} parent=5 // pred_fallthru
      _
    %p1464 = scmp.le.s32.totalorder 2, %s14
    // Predicated region
    $region73: #{gcn_layer.1} parent=5 // pred_check
      %p1465 = pneg %p1464
    $region74: #{gcn_layer.1} parent=5 // pred_check_branch
      %1467 = sbr.rel (%p1465) target = $region76
    $region75: #{gcn_layer.1} parent=5 // pred_region
      %s1468 = ssub.s32 %s14, 2
    $region76: #{gcn_layer.1} parent=5 // pred_fallthru
      _
  $region6: #{gcn_layer.1} parent=0 // loop_footer
    %s18 = sadd.s32 1, %s14
  $region7: #{gcn_layer.1} parent=0 // loop_footer_branch
    %13 = sbr.rel target = $region3
  $region8: #{gcn_layer.1} parent=0 // loop_exit
    _

</llo_original>
